<compile_context>
chip_gen: v5e
topology: v5e:2x2
jax: 0.10.0
libtpu: 0.0.40
codegen_flags: <defaults>
</compile_context>

<pallas_src>
import functools

import jax
import jax.numpy as jnp
import numpy as np
from jax.experimental import pallas as pl
from jax.experimental.pallas import tpu as pltpu


def _round_up(x, m):
    return (x + m - 1) // m * m


# ----------------------------- Pallas kernels ------------------------------ #
def _mm_bn_kernel(x_ref, w_ref, shift_ref, o_ref, *, relu):
    # Single-K-step matmul: out = (x @ w) + shift (+ ReLU).  BN scale is
    # pre-folded into w.  No scratch / reduction axis needed.
    acc = jnp.dot(x_ref[...], w_ref[...], preferred_element_type=jnp.float32)
    r = acc + shift_ref[...]
    if relu:
        r = jnp.maximum(r, 0.0)
    o_ref[...] = r.astype(o_ref.dtype)


def _mm_bn_kernel_ktiled(x_ref, w_ref, shift_ref, o_ref, acc_ref, *, relu):
    # K-tiled variant (only used when Kp > 512): f32 VMEM accumulator.
    @pl.when(pl.program_id(2) == 0)
    def _():
        acc_ref[...] = jnp.zeros_like(acc_ref)

    acc_ref[...] += jnp.dot(x_ref[...], w_ref[...],
                            preferred_element_type=jnp.float32)

    @pl.when(pl.program_id(2) == pl.num_programs(2) - 1)
    def _():
        r = acc_ref[...] + shift_ref[...]
        if relu:
            r = jnp.maximum(r, 0.0)
        o_ref[...] = r.astype(o_ref.dtype)


def _conv3x3_kernel(xq_ref, w_ref, shift_ref, o_ref, acc_ref, *, ho, wo, stride):
    # One full image per grid step.  All 9 taps unrolled; each tap is a
    # contiguous slice of the phase-decomposed padded input and one MXU
    # matmul with M = ho*wo rows, accumulated into an f32 VMEM scratch.
    #   xq_ref   : (Hq, stride*stride, Wq, Cin)   padded, phase-decomposed
    #   w_ref    : (9, Cin, Cout)                 BN scale folded, resident
    #   o_ref    : (ho*wo, Cout)
    for kh in range(3):
        qh, ph = divmod(kh, stride)
        for kw in range(3):
            qw, pw = divmod(kw, stride)
            lhs = xq_ref[pl.ds(qh, ho), ph * stride + pw, pl.ds(qw, wo), :]
            lhs = lhs.reshape(ho * wo, lhs.shape[-1])     # wo % 8 == 0 -> free
            d = jnp.dot(lhs, w_ref[kh * 3 + kw],
                        preferred_element_type=jnp.float32)
            if kh == 0 and kw == 0:
                acc_ref[...] = d
            else:
                acc_ref[...] += d
    o_ref[...] = jnp.maximum(acc_ref[...] + shift_ref[...],
                             0.0).astype(o_ref.dtype)


def _conv3_proj_kernel(x2_ref, w3_ref, xs_ref, ws_ref, shift_ref, o_ref, acc_ref):
    # relu(x2 @ w3 + xs @ ws + (shift3 + shift_s)) : conv3 + projection
    # shortcut + residual + ReLU fused; dots accumulate into f32 scratch.
    acc_ref[...] = jnp.dot(x2_ref[...], w3_ref[...],
                           preferred_element_type=jnp.float32)
    acc_ref[...] += jnp.dot(xs_ref[...], ws_ref[...],
                            preferred_element_type=jnp.float32)
    o_ref[...] = jnp.maximum(acc_ref[...] + shift_ref[...],
                             0.0).astype(o_ref.dtype)


def _conv3_id_kernel(x2_ref, w3_ref, sc_ref, shift_ref, o_ref, acc_ref):
    # relu(x2 @ w3 + shift3 + identity-shortcut); shortcut is original f32 x.
    acc_ref[...] = jnp.dot(x2_ref[...], w3_ref[...],
                           preferred_element_type=jnp.float32)
    o_ref[...] = jnp.maximum(acc_ref[...] + sc_ref[...] + shift_ref[...],
                             0.0).astype(o_ref.dtype)


# ----------------------------- Pallas wrappers ------------------------------ #
def matmul_bn_act(x, w, shift, *, relu=True, out_dtype=jnp.bfloat16):
    """(x @ w) + shift (+ ReLU), bf16 MXU, f32 accumulation, weight-stationary."""
    M, K = x.shape
    N = w.shape[1]
    Kp = _round_up(K, 128)
    Np = _round_up(N, 128)
    TM = min(512, _round_up(M, 8))
    Mp = _round_up(M, TM)
    TN = Np if Np <= 512 else (256 if Np % 256 == 0 else 128)

    xb = jnp.pad(x.astype(jnp.bfloat16), ((0, Mp - M), (0, Kp - K)))
    wb = jnp.pad(w.astype(jnp.bfloat16), ((0, Kp - K), (0, Np - N)))
    sb = jnp.pad(shift.astype(jnp.float32), (0, Np - N)).reshape(1, Np)

    if Kp <= 512:
        # Single K step: no reduction grid axis, no accumulator scratch.
        out = pl.pallas_call(
            functools.partial(_mm_bn_kernel, relu=relu),
            out_shape=jax.ShapeDtypeStruct((Mp, Np), out_dtype),
            grid=(Np // TN, Mp // TM),                    # M innermost
            in_specs=[
                pl.BlockSpec((TM, Kp), lambda j, i: (i, 0)),
                pl.BlockSpec((Kp, TN), lambda j, i: (0, j)),  # weight-stationary
                pl.BlockSpec((1, TN), lambda j, i: (0, j)),
            ],
            out_specs=pl.BlockSpec((TM, TN), lambda j, i: (i, j)),
            compiler_params=pltpu.CompilerParams(
                dimension_semantics=("parallel", "parallel")),
        )(xb, wb, sb)
    else:
        TK = next(t for t in (512, 256, 128) if Kp % t == 0)
        out = pl.pallas_call(
            functools.partial(_mm_bn_kernel_ktiled, relu=relu),
            out_shape=jax.ShapeDtypeStruct((Mp, Np), out_dtype),
            grid=(Np // TN, Mp // TM, Kp // TK),
            in_specs=[
                pl.BlockSpec((TM, TK), lambda j, i, k: (i, k)),
                pl.BlockSpec((TK, TN), lambda j, i, k: (k, j)),
                pl.BlockSpec((1, TN), lambda j, i, k: (0, j)),
            ],
            out_specs=pl.BlockSpec((TM, TN), lambda j, i, k: (i, j)),
            scratch_shapes=[pltpu.VMEM((TM, TN), jnp.float32)],
            compiler_params=pltpu.CompilerParams(
                dimension_semantics=("parallel", "parallel", "arbitrary")),
        )(xb, wb, sb)
    return out[:M, :N]


def conv3x3_bn_relu(x_nhwc, w2, shift2, stride):
    """3x3 conv (pad=1, stride) + folded-BN shift + ReLU.

    x_nhwc: (Nb, H, W, Cin) bf16, Cin a multiple of 128.
    w2:     (9, Cin, Cout) bf16, BN scale folded, Cout a multiple of 128.
    Returns (Nb, Ho, Wo, Cout) bf16.
    """
    Nb, H, W, Cin = x_nhwc.shape
    Cout = w2.shape[-1]
    Ho = (H - 1) // stride + 1
    Wo = (W - 1) // stride + 1
    Wo_p = _round_up(Wo, 8)                 # aligned M rows -> clean reshape
    q_max = 2 // stride                     # max tap block offset
    Hq = max(-(-(H + 2) // stride), q_max + Ho)
    Wq = max(-(-(W + 2) // stride), q_max + Wo_p)
    Hpad, Wpad = Hq * stride, Wq * stride
    S2 = stride * stride

    # Spatial zero pad + phase decomposition: xq[n,hq,ph*stride+pw,wq,c]
    #   = xpad[n, hq*stride+ph, wq*stride+pw, c].  Trailing dims (Wq, Cin).
    xq = jnp.pad(x_nhwc, ((0, 0), (1, Hpad - H - 1), (1, Wpad - W - 1), (0, 0)))
    xq = xq.reshape(Nb, Hq, stride, Wq, stride, Cin)
    xq = jnp.transpose(xq, (0, 1, 2, 4, 3, 5)).reshape(Nb, Hq, S2, Wq, Cin)
    shift2 = shift2.astype(jnp.float32).reshape(1, Cout)

    kernel = functools.partial(_conv3x3_kernel, ho=Ho, wo=Wo_p, stride=stride)
    out = pl.pallas_call(
        kernel,
        out_shape=jax.ShapeDtypeStruct((Nb, Ho * Wo_p, Cout), jnp.bfloat16),
        grid=(Nb,),
        in_specs=[
            pl.BlockSpec((None, Hq, S2, Wq, Cin), lambda n: (n, 0, 0, 0, 0)),
            pl.BlockSpec((9, Cin, Cout), lambda n: (0, 0, 0)),
            pl.BlockSpec((1, Cout), lambda n: (0, 0)),
        ],
        out_specs=pl.BlockSpec((None, Ho * Wo_p, Cout), lambda n: (n, 0, 0)),
        scratch_shapes=[pltpu.VMEM((Ho * Wo_p, Cout), jnp.float32)],
        compiler_params=pltpu.CompilerParams(
            dimension_semantics=("parallel",)),
    )(xq, w2, shift2)

    out = out.reshape(Nb, Ho, Wo_p, Cout)
    if Wo_p != Wo:
        out = out[:, :, :Wo, :]             # strip alignment-only columns
    return out


def conv3_residual(x2, w3, shift, shortcut, ws=None, out_dtype=jnp.float32):
    """relu(x2 @ w3 + shift + (shortcut @ ws | identity shortcut)), fused."""
    M, K3 = x2.shape
    N = w3.shape[1]
    K3p = _round_up(K3, 128)
    Np = _round_up(N, 128)
    TM = min(512, _round_up(M, 8))
    Mp = _round_up(M, TM)
    TN = Np if Np <= 512 else (256 if Np % 256 == 0 else 128)

    x2b = jnp.pad(x2.astype(jnp.bfloat16), ((0, Mp - M), (0, K3p - K3)))
    w3b = jnp.pad(w3.astype(jnp.bfloat16), ((0, K3p - K3), (0, Np - N)))
    sb = jnp.pad(shift.astype(jnp.float32), (0, Np - N)).reshape(1, Np)

    in_specs = [
        pl.BlockSpec((TM, K3p), lambda j, i: (i, 0)),
        pl.BlockSpec((K3p, TN), lambda j, i: (0, j)),      # weight-stationary
    ]
    if ws is not None:
        Ks = shortcut.shape[1]
        Ksp = _round_up(Ks, 128)
        scb = jnp.pad(shortcut.astype(jnp.bfloat16),
                      ((0, Mp - M), (0, Ksp - Ks)))
        wsb = jnp.pad(ws.astype(jnp.bfloat16), ((0, Ksp - Ks), (0, Np - N)))
        in_specs += [
            pl.BlockSpec((TM, Ksp), lambda j, i: (i, 0)),
            pl.BlockSpec((Ksp, TN), lambda j, i: (0, j)),  # weight-stationary
        ]
        kernel = _conv3_proj_kernel
        args = (x2b, w3b, scb, wsb)
    else:
        # Identity shortcut: original f32 values (full precision), added in f32.
        scb = jnp.pad(shortcut.astype(jnp.float32),
                      ((0, Mp - M), (0, Np - shortcut.shape[1])))
        in_specs += [pl.BlockSpec((TM, TN), lambda j, i: (i, j))]
        kernel = _conv3_id_kernel
        args = (x2b, w3b, scb)

    in_specs += [pl.BlockSpec((1, TN), lambda j, i: (0, j))]
    args = args + (sb,)

    out = pl.pallas_call(
        kernel,
        out_shape=jax.ShapeDtypeStruct((Mp, Np), out_dtype),
        grid=(Np // TN, Mp // TM),                         # M innermost
        in_specs=in_specs,
        out_specs=pl.BlockSpec((TM, TN), lambda j, i: (i, j)),
        scratch_shapes=[pltpu.VMEM((TM, TN), jnp.float32)],
        compiler_params=pltpu.CompilerParams(
            dimension_semantics=("parallel", "parallel")),
    )(*args)
    return out[:M, :N]


# --------------------------- Bottleneck forward ----------------------------- #
def _fold_bn(gamma, beta, mean, var, eps=1e-5):
    scale = gamma / jnp.sqrt(var + eps)
    shift = beta - mean * scale
    return scale, shift


def bottleneck_forward(x_nchw, params, stride):
    """Pallas implementation.  x_nchw: (N, Cin, H, W) f32 -> (N, 4*P, Ho, Wo)."""
    x = jnp.transpose(x_nchw, (0, 2, 3, 1))                      # NHWC f32
    Nb, H, W, Cin = x.shape
    P = params["w1"].shape[1]
    C3 = 4 * P

    Cinp = _round_up(Cin, 128)
    Pp = _round_up(P, 128)
    C3p = _round_up(C3, 128)

    s1, b1 = _fold_bn(*params["bn1"])
    s2, b2 = _fold_bn(*params["bn2"])
    s3, b3 = _fold_bn(*params["bn3"])

    # Fold BN scale into weight output columns (eval-mode constants), cast to
    # bf16 for the MXU, and pad channel dims to 128 lanes.
    w1p = jnp.pad((params["w1"] * s1[None, :]).astype(jnp.bfloat16),
                  ((0, Cinp - Cin), (0, Pp - P)))
    w2p = jnp.pad((params["w2"] * s2[None, None, :]).astype(jnp.bfloat16),
                  ((0, 0), (0, Pp - P), (0, Pp - P)))
    w3p = jnp.pad((params["w3"] * s3[None, :]).astype(jnp.bfloat16),
                  ((0, Pp - P), (0, C3p - C3)))
    b1p = jnp.pad(b1, (0, Pp - P))
    b2p = jnp.pad(b2, (0, Pp - P))

    xb = jnp.pad(x.astype(jnp.bfloat16),
                 ((0, 0), (0, 0), (0, 0), (0, Cinp - Cin)))

    # conv1 (1x1) + bn1 + relu  -- single-K bf16 MXU matmul
    out1 = matmul_bn_act(xb.reshape(Nb * H * W, Cinp), w1p, b1p, relu=True,
                         out_dtype=jnp.bfloat16).reshape(Nb, H, W, Pp)

    # conv2 (3x3, stride, pad=1) + bn2 + relu -- all 9 taps in one kernel step
    out2 = conv3x3_bn_relu(out1, w2p, b2p, stride)               # (Nb,Ho,Wo,Pp)
    _, Ho, Wo, _ = out2.shape
    x2 = out2.reshape(Nb * Ho * Wo, Pp)

    # conv3 (1x1) + bn3 + shortcut + residual add + relu (one fused kernel)
    if stride != 1 or Cin != C3:
        ss, bs = _fold_bn(*params["bns"])
        wsp = jnp.pad((params["ws"] * ss[None, :]).astype(jnp.bfloat16),
                      ((0, Cinp - Cin), (0, C3p - C3)))
        b3s = jnp.pad(b3 + bs, (0, C3p - C3))
        xs = xb[:, ::stride, ::stride, :].reshape(Nb * Ho * Wo, Cinp)
        out3 = conv3_residual(x2, w3p, b3s, xs, ws=wsp)
    else:
        b3p = jnp.pad(b3, (0, C3p - C3))
        # Identity shortcut fed at full f32 precision (Cin == C3 here).
        sc = jnp.pad(x.reshape(Nb * H * W, Cin), ((0, 0), (0, C3p - C3)))
        out3 = conv3_residual(x2, w3p, b3p, sc, ws=None)

    out3 = out3[:, :C3].reshape(Nb, Ho, Wo, C3)
    return jnp.transpose(out3, (0, 3, 1, 2)).astype(x_nchw.dtype)


# ------------------------- Pure-JAX reference (NCHW) ------------------------ #
def _conv_nchw(x, w_oihw, stride=1, padding=0):
    return jax.lax.conv_general_dilated(
        x, w_oihw, window_strides=(stride, stride),
        padding=[(padding, padding), (padding, padding)],
        dimension_numbers=("NCHW", "OIHW", "NCHW"))


def _bn_nchw(x, bn, eps=1e-5):
    gamma, beta, mean, var = bn
    scale = gamma / jnp.sqrt(var + eps)
    shift = beta - mean * scale
    return x * scale[None, :, None, None] + shift[None, :, None, None]


def bottleneck_reference(x, torch_weights, params, stride):
    w1, w2, w3, ws = torch_weights
    out = jax.nn.relu(_bn_nchw(_conv_nchw(x, w1), params["bn1"]))
    out = jax.nn.relu(_bn_nchw(_conv_nchw(out, w2, stride=stride, padding=1),
                               params["bn2"]))
    out = _bn_nchw(_conv_nchw(out, w3), params["bn3"])
    if ws is not None:
        sc = _bn_nchw(_conv_nchw(x, ws, stride=stride), params["bns"])
    else:
        sc = x
    return jax.nn.relu(out + sc)


# ------------------------------ Param builder ------------------------------- #
def make_bottleneck_params(key, in_planes, planes, stride, exp=4):
    keys = jax.random.split(key, 8)
    w1_t = jax.random.normal(keys[0], (planes, in_planes, 1, 1), jnp.float32) * 0.1
    w2_t = jax.random.normal(keys[1], (planes, planes, 3, 3), jnp.float32) * 0.1
    w3_t = jax.random.normal(keys[2], (exp * planes, planes, 1, 1), jnp.float32) * 0.1
    has_proj = (stride != 1) or (in_planes != exp * planes)
    ws_t = (jax.random.normal(keys[3], (exp * planes, in_planes, 1, 1),
                              jnp.float32) * 0.1) if has_proj else None

    def make_bn(k, c):
        kg, kb, km, kv = jax.random.split(k, 4)
        gamma = 1.0 + 0.1 * jax.random.normal(kg, (c,), jnp.float32)
        beta = 0.1 * jax.random.normal(kb, (c,), jnp.float32)
        mean = 0.1 * jax.random.normal(km, (c,), jnp.float32)
        var = 1.0 + 0.1 * jax.random.uniform(kv, (c,), jnp.float32)
        return (gamma, beta, mean, var)

    params = {
        # matmul-layout weights: (Cin, Cout); conv2 -> (kh*3+kw, Cin, Cout)
        "w1": jnp.transpose(w1_t[:, :, 0, 0], (1, 0)),
        "w2": jnp.transpose(w2_t, (2, 3, 1, 0)).reshape(9, planes, planes),
        "w3": jnp.transpose(w3_t[:, :, 0, 0], (1, 0)),
        "bn1": make_bn(keys[4], planes),
        "bn2": make_bn(keys[5], planes),
        "bn3": make_bn(keys[6], exp * planes),
    }
    if has_proj:
        params["ws"] = jnp.transpose(ws_t[:, :, 0, 0], (1, 0))
        params["bns"] = make_bn(keys[7], exp * planes)
    return params, (w1_t, w2_t, w3_t, ws_t)


# --------------------------------- Main ------------------------------------ #
if __name__ == "__main__":
    Nb, H, W = 2, 8, 8
    configs = [
        dict(name="projection/stride2", in_planes=8, planes=4, stride=2),
        dict(name="identity/stride1", in_planes=16, planes=4, stride=1),
    ]

    fwd = jax.jit(bottleneck_forward, static_argnames=("stride",))
    root = jax.random.PRNGKey(0)

    for i, cfg in enumerate(configs):
        kp, kx = jax.random.split(jax.random.fold_in(root, i))
        params, torch_w = make_bottleneck_params(
            kp, cfg["in_planes"], cfg["planes"], cfg["stride"])
        x = jax.random.normal(kx, (Nb, cfg["in_planes"], H, W), jnp.float32)

        out = jax.block_until_ready(fwd(x, params, stride=cfg["stride"]))
        ref = jax.block_until_ready(
            bottleneck_reference(x, torch_w, params, cfg["stride"]))

        Ho = (H + 2 - 3) // cfg["stride"] + 1
        assert out.shape == (Nb, 4 * cfg["planes"], Ho, Ho), (cfg["name"], out.shape)
        # bf16 MXU inputs (f32 accumulation) -> looser tolerance than pure f32.
        np.testing.assert_allclose(np.asarray(out), np.asarray(ref),
                                   rtol=2e-2, atol=2e-2)

    print("KERNEL_OK")
</pallas_src>

<mosaic_0001>
module attributes {stable_mosaic.version = 11 : i64} {
  func.func @_mm_bn_kernel(%arg0: i32, %arg1: i32, %arg2: memref<128x128xbf16, #tpu.memory_space<vmem>>, %arg3: memref<128x128xbf16, #tpu.memory_space<vmem>>, %arg4: memref<1x128xf32, #tpu.memory_space<vmem>>, %arg5: memref<128x128xbf16, #tpu.memory_space<vmem>>) attributes {dimension_semantics = [#tpu.dimension_semantics<parallel>, #tpu.dimension_semantics<parallel>], iteration_bounds = array<i64: 1, 1>, scalar_prefetch = 0 : i64, scratch_operands = 0 : i64, tpu.core_type = #tpu.core_type<tc>, window_params = [{transform_indices = @transform_0, window_bounds = array<i64: 128, 128>}, {transform_indices = @transform_1, window_bounds = array<i64: 128, 128>}, {transform_indices = @transform_2, window_bounds = array<i64: 1, 128>}, {transform_indices = @transform_3, window_bounds = array<i64: 128, 128>}]} {
    %c0 = arith.constant 0 : index
    %c0_0 = arith.constant 0 : index
    %0 = vector.load %arg2[%c0, %c0_0] : memref<128x128xbf16, #tpu.memory_space<vmem>>, vector<128x128xbf16>
    %c0_1 = arith.constant 0 : index
    %c0_2 = arith.constant 0 : index
    %1 = vector.load %arg3[%c0_1, %c0_2] : memref<128x128xbf16, #tpu.memory_space<vmem>>, vector<128x128xbf16>
    %cst = arith.constant dense<0.000000e+00> : vector<128x128xf32>
    %2 = tpu.matmul %0, %1, %cst {dimension_numbers = #tpu.dot_dimension_numbers<[1], [0], [0], [1], [0, 0, 1, 1], [], []>} : vector<128x128xbf16>, vector<128x128xbf16>, vector<128x128xf32> -> vector<128x128xf32>
    %c0_3 = arith.constant 0 : index
    %c0_4 = arith.constant 0 : index
    %3 = vector.load %arg4[%c0_3, %c0_4] : memref<1x128xf32, #tpu.memory_space<vmem>>, vector<1x128xf32>
    %4 = vector.broadcast %3 : vector<1x128xf32> to vector<128x128xf32>
    %5 = arith.addf %2, %4 : vector<128x128xf32>
    %cst_5 = arith.constant 0.000000e+00 : f32
    %6 = vector.broadcast %cst_5 : f32 to vector<128x128xf32>
    %7 = arith.maximumf %5, %6 : vector<128x128xf32>
    %8 = arith.truncf %7 : vector<128x128xf32> to vector<128x128xbf16>
    %c0_6 = arith.constant 0 : index
    %c0_7 = arith.constant 0 : index
    %9 = vector.load %arg5[%c0_6, %c0_7] : memref<128x128xbf16, #tpu.memory_space<vmem>>, vector<128x128xbf16>
    tpu.vector_store %arg5[%c0_6, %c0_7], %8 {strides = array<i32>} : memref<128x128xbf16, #tpu.memory_space<vmem>>, vector<128x128xbf16>,
    return
  }
  func.func @transform_0(%arg0: i32, %arg1: i32) -> (i32, i32) {
    %c0_i32 = arith.constant 0 : i32
    %c0_i32_0 = arith.constant 0 : i32
    return %arg1, %c0_i32 : i32, i32
  }
  func.func @transform_1(%arg0: i32, %arg1: i32) -> (i32, i32) {
    %c0_i32 = arith.constant 0 : i32
    %c0_i32_0 = arith.constant 0 : i32
    return %c0_i32, %arg0 : i32, i32
  }
  func.func @transform_2(%arg0: i32, %arg1: i32) -> (i32, i32) {
    %c0_i32 = arith.constant 0 : i32
    %c0_i32_0 = arith.constant 0 : i32
    return %c0_i32, %arg0 : i32, i32
  }
  func.func @transform_3(%arg0: i32, %arg1: i32) -> (i32, i32) {
    %c0_i32 = arith.constant 0 : i32
    return %arg1, %arg0 : i32, i32
  }
}

module attributes {stable_mosaic.version = 11 : i64} {
  func.func @_conv3x3_kernel(%arg0: i32, %arg1: memref<1x5x4x9x128xbf16, #tpu.memory_space<vmem>>, %arg2: memref<9x128x128xbf16, #tpu.memory_space<vmem>>, %arg3: memref<1x128xf32, #tpu.memory_space<vmem>>, %arg4: memref<1x32x128xbf16, #tpu.memory_space<vmem>>, %arg5: memref<32x128xf32, #tpu.memory_space<vmem>>) attributes {dimension_semantics = [#tpu.dimension_semantics<parallel>], iteration_bounds = array<i64: 2>, scalar_prefetch = 0 : i64, scratch_operands = 1 : i64, tpu.core_type = #tpu.core_type<tc>, window_params = [{transform_indices = @transform_0, window_bounds = array<i64: 1, 5, 4, 9, 128>}, {pipeline_mode = #tpu.pipeline_mode<synchronous>, transform_indices = @transform_1, window_bounds = array<i64: 9, 128, 128>}, {pipeline_mode = #tpu.pipeline_mode<synchronous>, transform_indices = @transform_2, window_bounds = array<i64: 1, 128>}, {transform_indices = @transform_3, window_bounds = array<i64: 1, 32, 128>}]} {
    %c0 = arith.constant 0 : index
    %c0_0 = arith.constant 0 : index
    %c0_1 = arith.constant 0 : index
    %c0_2 = arith.constant 0 : index
    %c0_3 = arith.constant 0 : index
    %0 = vector.load %arg1[%c0, %c0_0, %c0_1, %c0_2, %c0_3] : memref<1x5x4x9x128xbf16, #tpu.memory_space<vmem>>, vector<1x4x1x8x128xbf16>
    %1 = vector.shape_cast %0 : vector<1x4x1x8x128xbf16> to vector<4x8x128xbf16>
    %2 = vector.shape_cast %1 : vector<4x8x128xbf16> to vector<32x128xbf16>
    %c0_4 = arith.constant 0 : index
    %c0_5 = arith.constant 0 : index
    %c0_6 = arith.constant 0 : index
    %3 = vector.load %arg2[%c0_4, %c0_5, %c0_6] : memref<9x128x128xbf16, #tpu.memory_space<vmem>>, vector<1x128x128xbf16>
    %4 = vector.shape_cast %3 : vector<1x128x128xbf16> to vector<128x128xbf16>
    %cst = arith.constant dense<0.000000e+00> : vector<32x128xf32>
    %5 = tpu.matmul %2, %4, %cst {dimension_numbers = #tpu.dot_dimension_numbers<[1], [0], [0], [1], [0, 0, 1, 1], [], []>} : vector<32x128xbf16>, vector<128x128xbf16>, vector<32x128xf32> -> vector<32x128xf32>
    %c0_7 = arith.constant 0 : index
    %c0_8 = arith.constant 0 : index
    %6 = vector.load %arg5[%c0_7, %c0_8] : memref<32x128xf32, #tpu.memory_space<vmem>>, vector<32x128xf32>
    tpu.vector_store %arg5[%c0_7, %c0_8], %5 {strides = array<i32>} : memref<32x128xf32, #tpu.memory_space<vmem>>, vector<32x128xf32>,
    %c0_9 = arith.constant 0 : index
    %c0_10 = arith.constant 0 : index
    %c1 = arith.constant 1 : index
    %c0_11 = arith.constant 0 : index
    %c0_12 = arith.constant 0 : index
    %7 = vector.load %arg1[%c0_9, %c0_10, %c1, %c0_11, %c0_12] : memref<1x5x4x9x128xbf16, #tpu.memory_space<vmem>>, vector<1x4x1x8x128xbf16>
    %8 = vector.shape_cast %7 : vector<1x4x1x8x128xbf16> to vector<4x8x128xbf16>
    %9 = vector.shape_cast %8 : vector<4x8x128xbf16> to vector<32x128xbf16>
    %c1_13 = arith.constant 1 : index
    %c0_14 = arith.constant 0 : index
    %c0_15 = arith.constant 0 : index
    %10 = vector.load %arg2[%c1_13, %c0_14, %c0_15] : memref<9x128x128xbf16, #tpu.memory_space<vmem>>, vector<1x128x128xbf16>
    %11 = vector.shape_cast %10 : vector<1x128x128xbf16> to vector<128x128xbf16>
    %cst_16 = arith.constant dense<0.000000e+00> : vector<32x128xf32>
    %12 = tpu.matmul %9, %11, %cst_16 {dimension_numbers = #tpu.dot_dimension_numbers<[1], [0], [0], [1], [0, 0, 1, 1], [], []>} : vector<32x128xbf16>, vector<128x128xbf16>, vector<32x128xf32> -> vector<32x128xf32>
    %c0_17 = arith.constant 0 : index
    %c0_18 = arith.constant 0 : index
    %13 = vector.load %arg5[%c0_17, %c0_18] : memref<32x128xf32, #tpu.memory_space<vmem>>, vector<32x128xf32>
    %14 = arith.addf %13, %12 : vector<32x128xf32>
    %c0_19 = arith.constant 0 : index
    %c0_20 = arith.constant 0 : index
    %15 = vector.load %arg5[%c0_19, %c0_20] : memref<32x128xf32, #tpu.memory_space<vmem>>, vector<32x128xf32>
    tpu.vector_store %arg5[%c0_19, %c0_20], %14 {strides = array<i32>} : memref<32x128xf32, #tpu.memory_space<vmem>>, vector<32x128xf32>,
    %c0_21 = arith.constant 0 : index
    %c0_22 = arith.constant 0 : index
    %c0_23 = arith.constant 0 : index
    %c1_24 = arith.constant 1 : index
    %c0_25 = arith.constant 0 : index
    %16 = vector.load %arg1[%c0_21, %c0_22, %c0_23, %c1_24, %c0_25] : memref<1x5x4x9x128xbf16, #tpu.memory_space<vmem>>, vector<1x4x1x8x128xbf16>
    %17 = vector.shape_cast %16 : vector<1x4x1x8x128xbf16> to vector<4x8x128xbf16>
    %18 = vector.shape_cast %17 : vector<4x8x128xbf16> to vector<32x128xbf16>
    %c2 = arith.constant 2 : index
    %c0_26 = arith.constant 0 : index
    %c0_27 = arith.constant 0 : index
    %19 = vector.load %arg2[%c2, %c0_26, %c0_27] : memref<9x128x128xbf16, #tpu.memory_space<vmem>>, vector<1x128x128xbf16>
    %20 = vector.shape_cast %19 : vector<1x128x128xbf16> to vector<128x128xbf16>
    %cst_28 = arith.constant dense<0.000000e+00> : vector<32x128xf32>
    %21 = tpu.matmul %18, %20, %cst_28 {dimension_numbers = #tpu.dot_dimension_numbers<[1], [0], [0], [1], [0, 0, 1, 1], [], []>} : vector<32x128xbf16>, vector<128x128xbf16>, vector<32x128xf32> -> vector<32x128xf32>
    %c0_29 = arith.constant 0 : index
    %c0_30 = arith.constant 0 : index
    %22 = vector.load %arg5[%c0_29, %c0_30] : memref<32x128xf32, #tpu.memory_space<vmem>>, vector<32x128xf32>
    %23 = arith.addf %22, %21 : vector<32x128xf32>
    %c0_31 = arith.constant 0 : index
    %c0_32 = arith.constant 0 : index
    %24 = vector.load %arg5[%c0_31, %c0_32] : memref<32x128xf32, #tpu.memory_space<vmem>>, vector<32x128xf32>
    tpu.vector_store %arg5[%c0_31, %c0_32], %23 {strides = array<i32>} : memref<32x128xf32, #tpu.memory_space<vmem>>, vector<32x128xf32>,
    %c0_33 = arith.constant 0 : index
    %c0_34 = arith.constant 0 : index
    %c2_35 = arith.constant 2 : index
    %c0_36 = arith.constant 0 : index
    %c0_37 = arith.constant 0 : index
    %25 = vector.load %arg1[%c0_33, %c0_34, %c2_35, %c0_36, %c0_37] : memref<1x5x4x9x128xbf16, #tpu.memory_space<vmem>>, vector<1x4x1x8x128xbf16>
    %26 = vector.shape_cast %25 : vector<1x4x1x8x128xbf16> to vector<4x8x128xbf16>
    %27 = vector.shape_cast %26 : vector<4x8x128xbf16> to vector<32x128xbf16>
    %c3 = arith.constant 3 : index
    %c0_38 = arith.constant 0 : index
    %c0_39 = arith.constant 0 : index
    %28 = vector.load %arg2[%c3, %c0_38, %c0_39] : memref<9x128x128xbf16, #tpu.memory_space<vmem>>, vector<1x128x128xbf16>
    %29 = vector.shape_cast %28 : vector<1x128x128xbf16> to vector<128x128xbf16>
    %cst_40 = arith.constant dense<0.000000e+00> : vector<32x128xf32>
    %30 = tpu.matmul %27, %29, %cst_40 {dimension_numbers = #tpu.dot_dimension_numbers<[1], [0], [0], [1], [0, 0, 1, 1], [], []>} : vector<32x128xbf16>, vector<128x128xbf16>, vector<32x128xf32> -> vector<32x128xf32>
    %c0_41 = arith.constant 0 : index
    %c0_42 = arith.constant 0 : index
    %31 = vector.load %arg5[%c0_41, %c0_42] : memref<32x128xf32, #tpu.memory_space<vmem>>, vector<32x128xf32>
    %32 = arith.addf %31, %30 : vector<32x128xf32>
    %c0_43 = arith.constant 0 : index
    %c0_44 = arith.constant 0 : index
    %33 = vector.load %arg5[%c0_43, %c0_44] : memref<32x128xf32, #tpu.memory_space<vmem>>, vector<32x128xf32>
    tpu.vector_store %arg5[%c0_43, %c0_44], %32 {strides = array<i32>} : memref<32x128xf32, #tpu.memory_space<vmem>>, vector<32x128xf32>,
    %c0_45 = arith.constant 0 : index
    %c0_46 = arith.constant 0 : index
    %c3_47 = arith.constant 3 : index
    %c0_48 = arith.constant 0 : index
    %c0_49 = arith.constant 0 : index
    %34 = vector.load %arg1[%c0_45, %c0_46, %c3_47, %c0_48, %c0_49] : memref<1x5x4x9x128xbf16, #tpu.memory_space<vmem>>, vector<1x4x1x8x128xbf16>
    %35 = vector.shape_cast %34 : vector<1x4x1x8x128xbf16> to vector<4x8x128xbf16>
    %36 = vector.shape_cast %35 : vector<4x8x128xbf16> to vector<32x128xbf16>
    %c4 = arith.constant 4 : index
    %c0_50 = arith.constant 0 : index
    %c0_51 = arith.constant 0 : index
    %37 = vector.load %arg2[%c4, %c0_50, %c0_51] : memref<9x128x128xbf16, #tpu.memory_space<vmem>>, vector<1x128x128xbf16>
    %38 = vector.shape_cast %37 : vector<1x128x128xbf16> to vector<128x128xbf16>
    %cst_52 = arith.constant dense<0.000000e+00> : vector<32x128xf32>
    %39 = tpu.matmul %36, %38, %cst_52 {dimension_numbers = #tpu.dot_dimension_numbers<[1], [0], [0], [1], [0, 0, 1, 1], [], []>} : vector<32x128xbf16>, vector<128x128xbf16>, vector<32x128xf32> -> vector<32x128xf32>
    %c0_53 = arith.constant 0 : index
    %c0_54 = arith.constant 0 : index
    %40 = vector.load %arg5[%c0_53, %c0_54] : memref<32x128xf32, #tpu.memory_space<vmem>>, vector<32x128xf32>
    %41 = arith.addf %40, %39 : vector<32x128xf32>
    %c0_55 = arith.constant 0 : index
    %c0_56 = arith.constant 0 : index
    %42 = vector.load %arg5[%c0_55, %c0_56] : memref<32x128xf32, #tpu.memory_space<vmem>>, vector<32x128xf32>
    tpu.vector_store %arg5[%c0_55, %c0_56], %41 {strides = array<i32>} : memref<32x128xf32, #tpu.memory_space<vmem>>, vector<32x128xf32>,
    %c0_57 = arith.constant 0 : index
    %c0_58 = arith.constant 0 : index
    %c2_59 = arith.constant 2 : index
    %c1_60 = arith.constant 1 : index
    %c0_61 = arith.constant 0 : index
    %43 = vector.load %arg1[%c0_57, %c0_58, %c2_59, %c1_60, %c0_61] : memref<1x5x4x9x128xbf16, #tpu.memory_space<vmem>>, vector<1x4x1x8x128xbf16>
    %44 = vector.shape_cast %43 : vector<1x4x1x8x128xbf16> to vector<4x8x128xbf16>
    %45 = vector.shape_cast %44 : vector<4x8x128xbf16> to vector<32x128xbf16>
    %c5 = arith.constant 5 : index
    %c0_62 = arith.constant 0 : index
    %c0_63 = arith.constant 0 : index
    %46 = vector.load %arg2[%c5, %c0_62, %c0_63] : memref<9x128x128xbf16, #tpu.memory_space<vmem>>, vector<1x128x128xbf16>
    %47 = vector.shape_cast %46 : vector<1x128x128xbf16> to vector<128x128xbf16>
    %cst_64 = arith.constant dense<0.000000e+00> : vector<32x128xf32>
    %48 = tpu.matmul %45, %47, %cst_64 {dimension_numbers = #tpu.dot_dimension_numbers<[1], [0], [0], [1], [0, 0, 1, 1], [], []>} : vector<32x128xbf16>, vector<128x128xbf16>, vector<32x128xf32> -> vector<32x128xf32>
    %c0_65 = arith.constant 0 : index
    %c0_66 = arith.constant 0 : index
    %49 = vector.load %arg5[%c0_65, %c0_66] : memref<32x128xf32, #tpu.memory_space<vmem>>, vector<32x128xf32>
    %50 = arith.addf %49, %48 : vector<32x128xf32>
    %c0_67 = arith.constant 0 : index
    %c0_68 = arith.constant 0 : index
    %51 = vector.load %arg5[%c0_67, %c0_68] : memref<32x128xf32, #tpu.memory_space<vmem>>, vector<32x128xf32>
    tpu.vector_store %arg5[%c0_67, %c0_68], %50 {strides = array<i32>} : memref<32x128xf32, #tpu.memory_space<vmem>>, vector<32x128xf32>,
    %c0_69 = arith.constant 0 : index
    %c1_70 = arith.constant 1 : index
    %c0_71 = arith.constant 0 : index
    %c0_72 = arith.constant 0 : index
    %c0_73 = arith.constant 0 : index
    %52 = vector.load %arg1[%c0_69, %c1_70, %c0_71, %c0_72, %c0_73] : memref<1x5x4x9x128xbf16, #tpu.memory_space<vmem>>, vector<1x4x1x8x128xbf16>
    %53 = vector.shape_cast %52 : vector<1x4x1x8x128xbf16> to vector<4x8x128xbf16>
    %54 = vector.shape_cast %53 : vector<4x8x128xbf16> to vector<32x128xbf16>
    %c6 = arith.constant 6 : index
    %c0_74 = arith.constant 0 : index
    %c0_75 = arith.constant 0 : index
    %55 = vector.load %arg2[%c6, %c0_74, %c0_75] : memref<9x128x128xbf16, #tpu.memory_space<vmem>>, vector<1x128x128xbf16>
    %56 = vector.shape_cast %55 : vector<1x128x128xbf16> to vector<128x128xbf16>
    %cst_76 = arith.constant dense<0.000000e+00> : vector<32x128xf32>
    %57 = tpu.matmul %54, %56, %cst_76 {dimension_numbers = #tpu.dot_dimension_numbers<[1], [0], [0], [1], [0, 0, 1, 1], [], []>} : vector<32x128xbf16>, vector<128x128xbf16>, vector<32x128xf32> -> vector<32x128xf32>
    %c0_77 = arith.constant 0 : index
    %c0_78 = arith.constant 0 : index
    %58 = vector.load %arg5[%c0_77, %c0_78] : memref<32x128xf32, #tpu.memory_space<vmem>>, vector<32x128xf32>
    %59 = arith.addf %58, %57 : vector<32x128xf32>
    %c0_79 = arith.constant 0 : index
    %c0_80 = arith.constant 0 : index
    %60 = vector.load %arg5[%c0_79, %c0_80] : memref<32x128xf32, #tpu.memory_space<vmem>>, vector<32x128xf32>
    tpu.vector_store %arg5[%c0_79, %c0_80], %59 {strides = array<i32>} : memref<32x128xf32, #tpu.memory_space<vmem>>, vector<32x128xf32>,
    %c0_81 = arith.constant 0 : index
    %c1_82 = arith.constant 1 : index
    %c1_83 = arith.constant 1 : index
    %c0_84 = arith.constant 0 : index
    %c0_85 = arith.constant 0 : index
    %61 = vector.load %arg1[%c0_81, %c1_82, %c1_83, %c0_84, %c0_85] : memref<1x5x4x9x128xbf16, #tpu.memory_space<vmem>>, vector<1x4x1x8x128xbf16>
    %62 = vector.shape_cast %61 : vector<1x4x1x8x128xbf16> to vector<4x8x128xbf16>
    %63 = vector.shape_cast %62 : vector<4x8x128xbf16> to vector<32x128xbf16>
    %c7 = arith.constant 7 : index
    %c0_86 = arith.constant 0 : index
    %c0_87 = arith.constant 0 : index
    %64 = vector.load %arg2[%c7, %c0_86, %c0_87] : memref<9x128x128xbf16, #tpu.memory_space<vmem>>, vector<1x128x128xbf16>
    %65 = vector.shape_cast %64 : vector<1x128x128xbf16> to vector<128x128xbf16>
    %cst_88 = arith.constant dense<0.000000e+00> : vector<32x128xf32>
    %66 = tpu.matmul %63, %65, %cst_88 {dimension_numbers = #tpu.dot_dimension_numbers<[1], [0], [0], [1], [0, 0, 1, 1], [], []>} : vector<32x128xbf16>, vector<128x128xbf16>, vector<32x128xf32> -> vector<32x128xf32>
    %c0_89 = arith.constant 0 : index
    %c0_90 = arith.constant 0 : index
    %67 = vector.load %arg5[%c0_89, %c0_90] : memref<32x128xf32, #tpu.memory_space<vmem>>, vector<32x128xf32>
    %68 = arith.addf %67, %66 : vector<32x128xf32>
    %c0_91 = arith.constant 0 : index
    %c0_92 = arith.constant 0 : index
    %69 = vector.load %arg5[%c0_91, %c0_92] : memref<32x128xf32, #tpu.memory_space<vmem>>, vector<32x128xf32>
    tpu.vector_store %arg5[%c0_91, %c0_92], %68 {strides = array<i32>} : memref<32x128xf32, #tpu.memory_space<vmem>>, vector<32x128xf32>,
    %c0_93 = arith.constant 0 : index
    %c1_94 = arith.constant 1 : index
    %c0_95 = arith.constant 0 : index
    %c1_96 = arith.constant 1 : index
    %c0_97 = arith.constant 0 : index
    %70 = vector.load %arg1[%c0_93, %c1_94, %c0_95, %c1_96, %c0_97] : memref<1x5x4x9x128xbf16, #tpu.memory_space<vmem>>, vector<1x4x1x8x128xbf16>
    %71 = vector.shape_cast %70 : vector<1x4x1x8x128xbf16> to vector<4x8x128xbf16>
    %72 = vector.shape_cast %71 : vector<4x8x128xbf16> to vector<32x128xbf16>
    %c8 = arith.constant 8 : index
    %c0_98 = arith.constant 0 : index
    %c0_99 = arith.constant 0 : index
    %73 = vector.load %arg2[%c8, %c0_98, %c0_99] : memref<9x128x128xbf16, #tpu.memory_space<vmem>>, vector<1x128x128xbf16>
    %74 = vector.shape_cast %73 : vector<1x128x128xbf16> to vector<128x128xbf16>
    %cst_100 = arith.constant dense<0.000000e+00> : vector<32x128xf32>
    %75 = tpu.matmul %72, %74, %cst_100 {dimension_numbers = #tpu.dot_dimension_numbers<[1], [0], [0], [1], [0, 0, 1, 1], [], []>} : vector<32x128xbf16>, vector<128x128xbf16>, vector<32x128xf32> -> vector<32x128xf32>
    %c0_101 = arith.constant 0 : index
    %c0_102 = arith.constant 0 : index
    %76 = vector.load %arg5[%c0_101, %c0_102] : memref<32x128xf32, #tpu.memory_space<vmem>>, vector<32x128xf32>
    %77 = arith.addf %76, %75 : vector<32x128xf32>
    %c0_103 = arith.constant 0 : index
    %c0_104 = arith.constant 0 : index
    %78 = vector.load %arg5[%c0_103, %c0_104] : memref<32x128xf32, #tpu.memory_space<vmem>>, vector<32x128xf32>
    tpu.vector_store %arg5[%c0_103, %c0_104], %77 {strides = array<i32>} : memref<32x128xf32, #tpu.memory_space<vmem>>, vector<32x128xf32>,
    %c0_105 = arith.constant 0 : index
    %c0_106 = arith.constant 0 : index
    %79 = vector.load %arg5[%c0_105, %c0_106] : memref<32x128xf32, #tpu.memory_space<vmem>>, vector<32x128xf32>
    %c0_107 = arith.constant 0 : index
    %c0_108 = arith.constant 0 : index
    %80 = vector.load %arg3[%c0_107, %c0_108] : memref<1x128xf32, #tpu.memory_space<vmem>>, vector<1x128xf32>
    %81 = vector.broadcast %80 : vector<1x128xf32> to vector<32x128xf32>
    %82 = arith.addf %79, %81 : vector<32x128xf32>
    %cst_109 = arith.constant 0.000000e+00 : f32
    %83 = vector.broadcast %cst_109 : f32 to vector<32x128xf32>
    %84 = arith.maximumf %82, %83 : vector<32x128xf32>
    %85 = arith.truncf %84 : vector<32x128xf32> to vector<32x128xbf16>
    %c0_110 = arith.constant 0 : index
    %c0_111 = arith.constant 0 : index
    %c0_112 = arith.constant 0 : index
    %86 = vector.load %arg4[%c0_110, %c0_111, %c0_112] : memref<1x32x128xbf16, #tpu.memory_space<vmem>>, vector<1x32x128xbf16>
    %87 = vector.shape_cast %86 : vector<1x32x128xbf16> to vector<32x128xbf16>
    %88 = vector.shape_cast %85 : vector<32x128xbf16> to vector<1x32x128xbf16>
    tpu.vector_store %arg4[%c0_110, %c0_111, %c0_112], %88 {strides = array<i32>} : memref<1x32x128xbf16, #tpu.memory_space<vmem>>, vector<1x32x128xbf16>,
    return
  }
  func.func @transform_0(%arg0: i32) -> (i32, i32, i32, i32, i32) {
    %c0_i32 = arith.constant 0 : i32
    %c0_i32_0 = arith.constant 0 : i32
    %c0_i32_1 = arith.constant 0 : i32
    %c0_i32_2 = arith.constant 0 : i32
    %c0_i32_3 = arith.constant 0 : i32
    return %arg0, %c0_i32, %c0_i32_0, %c0_i32_1, %c0_i32_2 : i32, i32, i32, i32, i32
  }
  func.func @transform_1(%arg0: i32) -> (i32, i32, i32) {
    %c0_i32 = arith.constant 0 : i32
    %c0_i32_0 = arith.constant 0 : i32
    %c0_i32_1 = arith.constant 0 : i32
    %c0_i32_2 = arith.constant 0 : i32
    return %c0_i32, %c0_i32_0, %c0_i32_1 : i32, i32, i32
  }
  func.func @transform_2(%arg0: i32) -> (i32, i32) {
    %c0_i32 = arith.constant 0 : i32
    %c0_i32_0 = arith.constant 0 : i32
    %c0_i32_1 = arith.constant 0 : i32
    return %c0_i32, %c0_i32_0 : i32, i32
  }
  func.func @transform_3(%arg0: i32) -> (i32, i32, i32) {
    %c0_i32 = arith.constant 0 : i32
    %c0_i32_0 = arith.constant 0 : i32
    %c0_i32_1 = arith.constant 0 : i32
    return %arg0, %c0_i32, %c0_i32_0 : i32, i32, i32
  }
}

module attributes {stable_mosaic.version = 11 : i64} {
  func.func @_conv3_proj_kernel(%arg0: i32, %arg1: i32, %arg2: memref<32x128xbf16, #tpu.memory_space<vmem>>, %arg3: memref<128x128xbf16, #tpu.memory_space<vmem>>, %arg4: memref<32x128xbf16, #tpu.memory_space<vmem>>, %arg5: memref<128x128xbf16, #tpu.memory_space<vmem>>, %arg6: memref<1x128xf32, #tpu.memory_space<vmem>>, %arg7: memref<32x128xf32, #tpu.memory_space<vmem>>, %arg8: memref<32x128xf32, #tpu.memory_space<vmem>>) attributes {dimension_semantics = [#tpu.dimension_semantics<parallel>, #tpu.dimension_semantics<parallel>], iteration_bounds = array<i64: 1, 1>, scalar_prefetch = 0 : i64, scratch_operands = 1 : i64, tpu.core_type = #tpu.core_type<tc>, window_params = [{transform_indices = @transform_0, window_bounds = array<i64: 32, 128>}, {transform_indices = @transform_1, window_bounds = array<i64: 128, 128>}, {transform_indices = @transform_2, window_bounds = array<i64: 32, 128>}, {transform_indices = @transform_3, window_bounds = array<i64: 128, 128>}, {transform_indices = @transform_4, window_bounds = array<i64: 1, 128>}, {transform_indices = @transform_5, window_bounds = array<i64: 32, 128>}]} {
    %c0 = arith.constant 0 : index
    %c0_0 = arith.constant 0 : index
    %0 = vector.load %arg2[%c0, %c0_0] : memref<32x128xbf16, #tpu.memory_space<vmem>>, vector<32x128xbf16>
    %c0_1 = arith.constant 0 : index
    %c0_2 = arith.constant 0 : index
    %1 = vector.load %arg3[%c0_1, %c0_2] : memref<128x128xbf16, #tpu.memory_space<vmem>>, vector<128x128xbf16>
    %cst = arith.constant dense<0.000000e+00> : vector<32x128xf32>
    %2 = tpu.matmul %0, %1, %cst {dimension_numbers = #tpu.dot_dimension_numbers<[1], [0], [0], [1], [0, 0, 1, 1], [], []>} : vector<32x128xbf16>, vector<128x128xbf16>, vector<32x128xf32> -> vector<32x128xf32>
    %c0_3 = arith.constant 0 : index
    %c0_4 = arith.constant 0 : index
    %3 = vector.load %arg8[%c0_3, %c0_4] : memref<32x128xf32, #tpu.memory_space<vmem>>, vector<32x128xf32>
    tpu.vector_store %arg8[%c0_3, %c0_4], %2 {strides = array<i32>} : memref<32x128xf32, #tpu.memory_space<vmem>>, vector<32x128xf32>,
    %c0_5 = arith.constant 0 : index
    %c0_6 = arith.constant 0 : index
    %4 = vector.load %arg8[%c0_5, %c0_6] : memref<32x128xf32, #tpu.memory_space<vmem>>, vector<32x128xf32>
    %c0_7 = arith.constant 0 : index
    %c0_8 = arith.constant 0 : index
    %5 = vector.load %arg4[%c0_7, %c0_8] : memref<32x128xbf16, #tpu.memory_space<vmem>>, vector<32x128xbf16>
    %c0_9 = arith.constant 0 : index
    %c0_10 = arith.constant 0 : index
    %6 = vector.load %arg5[%c0_9, %c0_10] : memref<128x128xbf16, #tpu.memory_space<vmem>>, vector<128x128xbf16>
    %cst_11 = arith.constant dense<0.000000e+00> : vector<32x128xf32>
    %7 = tpu.matmul %5, %6, %cst_11 {dimension_numbers = #tpu.dot_dimension_numbers<[1], [0], [0], [1], [0, 0, 1, 1], [], []>} : vector<32x128xbf16>, vector<128x128xbf16>, vector<32x128xf32> -> vector<32x128xf32>
    %8 = arith.addf %4, %7 : vector<32x128xf32>
    %c0_12 = arith.constant 0 : index
    %c0_13 = arith.constant 0 : index
    %9 = vector.load %arg8[%c0_12, %c0_13] : memref<32x128xf32, #tpu.memory_space<vmem>>, vector<32x128xf32>
    tpu.vector_store %arg8[%c0_12, %c0_13], %8 {strides = array<i32>} : memref<32x128xf32, #tpu.memory_space<vmem>>, vector<32x128xf32>,
    %c0_14 = arith.constant 0 : index
    %c0_15 = arith.constant 0 : index
    %10 = vector.load %arg8[%c0_14, %c0_15] : memref<32x128xf32, #tpu.memory_space<vmem>>, vector<32x128xf32>
    %c0_16 = arith.constant 0 : index
    %c0_17 = arith.constant 0 : index
    %11 = vector.load %arg6[%c0_16, %c0_17] : memref<1x128xf32, #tpu.memory_space<vmem>>, vector<1x128xf32>
    %12 = vector.broadcast %11 : vector<1x128xf32> to vector<32x128xf32>
    %13 = arith.addf %10, %12 : vector<32x128xf32>
    %cst_18 = arith.constant 0.000000e+00 : f32
    %14 = vector.broadcast %cst_18 : f32 to vector<32x128xf32>
    %15 = arith.maximumf %13, %14 : vector<32x128xf32>
    %c0_19 = arith.constant 0 : index
    %c0_20 = arith.constant 0 : index
    %16 = vector.load %arg7[%c0_19, %c0_20] : memref<32x128xf32, #tpu.memory_space<vmem>>, vector<32x128xf32>
    tpu.vector_store %arg7[%c0_19, %c0_20], %15 {strides = array<i32>} : memref<32x128xf32, #tpu.memory_space<vmem>>, vector<32x128xf32>,
    return
  }
  func.func @transform_0(%arg0: i32, %arg1: i32) -> (i32, i32) {
    %c0_i32 = arith.constant 0 : i32
    %c0_i32_0 = arith.constant 0 : i32
    return %arg1, %c0_i32 : i32, i32
  }
  func.func @transform_1(%arg0: i32, %arg1: i32) -> (i32, i32) {
    %c0_i32 = arith.constant 0 : i32
    %c0_i32_0 = arith.constant 0 : i32
    return %c0_i32, %arg0 : i32, i32
  }
  func.func @transform_2(%arg0: i32, %arg1: i32) -> (i32, i32) {
    %c0_i32 = arith.constant 0 : i32
    %c0_i32_0 = arith.constant 0 : i32
    return %arg1, %c0_i32 : i32, i32
  }
  func.func @transform_3(%arg0: i32, %arg1: i32) -> (i32, i32) {
    %c0_i32 = arith.constant 0 : i32
    %c0_i32_0 = arith.constant 0 : i32
    return %c0_i32, %arg0 : i32, i32
  }
  func.func @transform_4(%arg0: i32, %arg1: i32) -> (i32, i32) {
    %c0_i32 = arith.constant 0 : i32
    %c0_i32_0 = arith.constant 0 : i32
    return %c0_i32, %arg0 : i32, i32
  }
  func.func @transform_5(%arg0: i32, %arg1: i32) -> (i32, i32) {
    %c0_i32 = arith.constant 0 : i32
    return %arg1, %arg0 : i32, i32
  }
}

</mosaic_0001>

<llo_original>
// kernel: bottleneck_forward.3
$region0: #{bottleneck_forward.3}
  #allocation0 [shape = 'u32[]', space=smem, size = 0x4, offset = 0x4, fixed_abs, tag = 'smem constant byte address 0x4 - core index']
  #allocation1 [shape = 'u32[72,128]{1,0:T(1,128)}', space=vmem, size = 0x9000, scoped, tag = 'internal scratch']
  %s0 = inlined_call_operand.vmem [shape: bf16[128,128], index: 0, kind: input, shape index: {}]
  %s1 = inlined_call_operand.vmem [shape: bf16[128,128], index: 1, kind: input, shape index: {}]
  %s2 = inlined_call_operand.vmem [shape: f32[1,128], index: 2, kind: input, shape index: {}]
  %s3 = inlined_call_operand.vmem [shape: bf16[128,128], index: 3, kind: output, shape index: {}]
  %s4 = sld [smem:[#allocation0]]
  $region22: #{bottleneck_forward.3} parent=0
    _
  %s6 = ssub.s32 1, %s4
  %s7 = scalar_select 0, %s6, %s4
  // Predicated region
  $region2: #{bottleneck_forward.3} parent=0 // pred_check
    _
  $region3: #{bottleneck_forward.3} parent=0 // pred_check_branch
    %9 = sbr.rel (0) target = $region5
  $region4: #{bottleneck_forward.3} parent=0 // pred_region
    _
  $region5: #{bottleneck_forward.3} parent=0 // pred_fallthru
    _
  // Predicated region
  $region6: #{bottleneck_forward.3} parent=0 // pred_check
    _
  $region7: #{bottleneck_forward.3} parent=0 // pred_check_branch
    %11 = sbr.rel (0) target = $region9
  $region8: #{bottleneck_forward.3} parent=0 // pred_region
    _
  $region9: #{bottleneck_forward.3} parent=0 // pred_fallthru
    _
  // Predicated region
  $region10: #{bottleneck_forward.3} parent=0 // pred_check
    _
  $region11: #{bottleneck_forward.3} parent=0 // pred_check_branch
    %13 = sbr.rel (0) target = $region13
  $region12: #{bottleneck_forward.3} parent=0 // pred_region
    _
  $region13: #{bottleneck_forward.3} parent=0 // pred_fallthru
    _
  %v14 = vld [vmem:[%s0] sm:$0xf]
  %v15 = vld [vmem:[%s0 + $0x4] sm:$0xf]
  %v16 = vld [vmem:[%s0 + $0x8] sm:$0xf]
  %v17 = vld [vmem:[%s0 + $0xc] sm:$0xf]
  %v18 = vld [vmem:[%s0 + $0x10] sm:$0xf]
  %v19 = vld [vmem:[%s0 + $0x14] sm:$0xf]
  %v20 = vld [vmem:[%s0 + $0x18] sm:$0xf]
  %v21 = vld [vmem:[%s0 + $0x1c] sm:$0xf]
  %v22 = vld [vmem:[%s0 + $0x20] sm:$0xf]
  %v23 = vld [vmem:[%s0 + $0x24] sm:$0xf]
  %v24 = vld [vmem:[%s0 + $0x28] sm:$0xf]
  %v25 = vld [vmem:[%s0 + $0x2c] sm:$0xf]
  %v26 = vld [vmem:[%s0 + $0x30] sm:$0xf]
  %v27 = vld [vmem:[%s0 + $0x34] sm:$0xf]
  %v28 = vld [vmem:[%s0 + $0x38] sm:$0xf]
  %v29 = vld [vmem:[%s0 + $0x3c] sm:$0xf]
  %v30 = vld [vmem:[%s1] sm:$0xf]
  %v31 = vld [vmem:[%s1 + $0x4] sm:$0xf]
  %v32 = vld [vmem:[%s1 + $0x8] sm:$0xf]
  %v33 = vld [vmem:[%s1 + $0xc] sm:$0xf]
  %v34 = vld [vmem:[%s1 + $0x10] sm:$0xf]
  %v35 = vld [vmem:[%s1 + $0x14] sm:$0xf]
  %v36 = vld [vmem:[%s1 + $0x18] sm:$0xf]
  %v37 = vld [vmem:[%s1 + $0x1c] sm:$0xf]
  %v38 = vld [vmem:[%s1 + $0x20] sm:$0xf]
  %v39 = vld [vmem:[%s1 + $0x24] sm:$0xf]
  %v40 = vld [vmem:[%s1 + $0x28] sm:$0xf]
  %v41 = vld [vmem:[%s1 + $0x2c] sm:$0xf]
  %v42 = vld [vmem:[%s1 + $0x30] sm:$0xf]
  %v43 = vld [vmem:[%s1 + $0x34] sm:$0xf]
  %v44 = vld [vmem:[%s1 + $0x38] sm:$0xf]
  %v45 = vld [vmem:[%s1 + $0x3c] sm:$0xf]
  %v46 = vld [vmem:[%s2] sm:$0x1]
  %v48 = vperm.slane %v46, 0
  %v66 = vunpack.c.l.b16 %v14
  %v67 = vunpack.c.l.b16 %v15
  %v68 = vunpack.c.l.b16 %v16
  %v69 = vunpack.c.l.b16 %v17
  %v70 = vunpack.c.l.b16 %v18
  %v71 = vunpack.c.l.b16 %v19
  %v72 = vunpack.c.l.b16 %v20
  %v73 = vunpack.c.l.b16 %v21
  %v74 = vunpack.c.l.b16 %v22
  %v75 = vunpack.c.l.b16 %v23
  %v76 = vunpack.c.l.b16 %v24
  %v77 = vunpack.c.l.b16 %v25
  %v78 = vunpack.c.l.b16 %v26
  %v79 = vunpack.c.l.b16 %v27
  %v80 = vunpack.c.l.b16 %v28
  %v81 = vunpack.c.l.b16 %v29
  %v82 = vpack.c.b16 %v67, %v66
  %v83 = vpack.c.b16 %v69, %v68
  %v84 = vpack.c.b16 %v71, %v70
  %v85 = vpack.c.b16 %v73, %v72
  %v86 = vpack.c.b16 %v75, %v74
  %v87 = vpack.c.b16 %v77, %v76
  %v88 = vpack.c.b16 %v79, %v78
  %v89 = vpack.c.b16 %v81, %v80
  %v114 = vunpack.c.l.b16 %v30
  %v115 = vunpack.c.l.b16 %v31
  %v116 = vunpack.c.l.b16 %v32
  %v117 = vunpack.c.l.b16 %v33
  %v118 = vunpack.c.l.b16 %v34
  %v119 = vunpack.c.l.b16 %v35
  %v120 = vunpack.c.l.b16 %v36
  %v121 = vunpack.c.l.b16 %v37
  %v122 = vunpack.c.l.b16 %v38
  %v123 = vunpack.c.l.b16 %v39
  %v124 = vunpack.c.l.b16 %v40
  %v125 = vunpack.c.l.b16 %v41
  %v126 = vunpack.c.l.b16 %v42
  %v127 = vunpack.c.l.b16 %v43
  %v128 = vunpack.c.l.b16 %v44
  %v129 = vunpack.c.l.b16 %v45
  %v130 = vpack.c.b16 %v115, %v114
  %v131 = vpack.c.b16 %v117, %v116
  %v132 = vpack.c.b16 %v119, %v118
  %v133 = vpack.c.b16 %v121, %v120
  %v134 = vpack.c.b16 %v123, %v122
  %v135 = vpack.c.b16 %v125, %v124
  %v136 = vpack.c.b16 %v127, %v126
  %v137 = vpack.c.b16 %v129, %v128
  %146 = vmatpush.bf16.msra.mxu0 %v137
  %147 = vmatpush.bf16.msra.mxu0 %v136
  %148 = vmatpush.bf16.msra.mxu0 %v135
  %149 = vmatpush.bf16.msra.mxu0 %v134
  %150 = vmatpush.bf16.msra.mxu0 %v133
  %151 = vmatpush.bf16.msra.mxu0 %v132
  %152 = vmatpush.bf16.msra.mxu0 %v131
  %153 = vmatpush.bf16.msra.mxu0 %v130
  %154 = vmatmul.bf16.gmra.mxu0 %v82
  %v155 = vpop.f32.mrf.mxu0
  %v156 = vadd.f32 %v48, %v155
  %v157 = vpop.f32.mrf.mxu0
  %v158 = vadd.f32 %v48, %v157
  %159 = vmatmul.bf16.gmra.mxu0 %v83
  %v160 = vpop.f32.mrf.mxu0
  %v161 = vadd.f32 %v48, %v160
  %v162 = vpop.f32.mrf.mxu0
  %v163 = vadd.f32 %v48, %v162
  %164 = vmatmul.bf16.gmra.mxu0 %v84
  %v165 = vpop.f32.mrf.mxu0
  %v166 = vadd.f32 %v48, %v165
  %v167 = vpop.f32.mrf.mxu0
  %v168 = vadd.f32 %v48, %v167
  %169 = vmatmul.bf16.gmra.mxu0 %v85
  %v170 = vpop.f32.mrf.mxu0
  %v171 = vadd.f32 %v48, %v170
  %v172 = vpop.f32.mrf.mxu0
  %v173 = vadd.f32 %v48, %v172
  %174 = vmatmul.bf16.gmra.mxu0 %v86
  %v175 = vpop.f32.mrf.mxu0
  %v176 = vadd.f32 %v48, %v175
  %v177 = vpop.f32.mrf.mxu0
  %v178 = vadd.f32 %v48, %v177
  %179 = vmatmul.bf16.gmra.mxu0 %v87
  %v180 = vpop.f32.mrf.mxu0
  %v181 = vadd.f32 %v48, %v180
  %v182 = vpop.f32.mrf.mxu0
  %v183 = vadd.f32 %v48, %v182
  %184 = vmatmul.bf16.gmra.mxu0 %v88
  %v185 = vpop.f32.mrf.mxu0
  %v186 = vadd.f32 %v48, %v185
  %v187 = vpop.f32.mrf.mxu0
  %v188 = vadd.f32 %v48, %v187
  %189 = vmatmul.bf16.gmra.mxu0 %v89
  %v190 = vpop.f32.mrf.mxu0
  %v191 = vadd.f32 %v48, %v190
  %v192 = vpop.f32.mrf.mxu0
  %v193 = vadd.f32 %v48, %v192
  %194 = vdwg.mxu0
  %v195 = vmax.f32 %v156, 0.0
  %v196 = vmax.f32 %v158, 0.0
  %v197 = vmax.f32 %v161, 0.0
  %v198 = vmax.f32 %v163, 0.0
  %v199 = vmax.f32 %v166, 0.0
  %v200 = vmax.f32 %v168, 0.0
  %v201 = vmax.f32 %v171, 0.0
  %v202 = vmax.f32 %v173, 0.0
  %v203 = vmax.f32 %v176, 0.0
  %v204 = vmax.f32 %v178, 0.0
  %v205 = vmax.f32 %v181, 0.0
  %v206 = vmax.f32 %v183, 0.0
  %v207 = vmax.f32 %v186, 0.0
  %v208 = vmax.f32 %v188, 0.0
  %v209 = vmax.f32 %v191, 0.0
  %v210 = vmax.f32 %v193, 0.0
  %v211 = vpack.c.bf16 %v195, %v195
  %v212 = vpack.c.bf16 %v196, %v196
  %v213 = vpack.c.bf16 %v197, %v197
  %v214 = vpack.c.bf16 %v198, %v198
  %v215 = vpack.c.bf16 %v199, %v199
  %v216 = vpack.c.bf16 %v200, %v200
  %v217 = vpack.c.bf16 %v201, %v201
  %v218 = vpack.c.bf16 %v202, %v202
  %v219 = vpack.c.bf16 %v203, %v203
  %v220 = vpack.c.bf16 %v204, %v204
  %v221 = vpack.c.bf16 %v205, %v205
  %v222 = vpack.c.bf16 %v206, %v206
  %v223 = vpack.c.bf16 %v207, %v207
  %v224 = vpack.c.bf16 %v208, %v208
  %v225 = vpack.c.bf16 %v209, %v209
  %v226 = vpack.c.bf16 %v210, %v210
  %227 = vst [vmem:[%s3] sm:$0xf] %v211
  %228 = vst [vmem:[%s3 + $0x4] sm:$0xf] %v212
  %229 = vst [vmem:[%s3 + $0x8] sm:$0xf] %v213
  %230 = vst [vmem:[%s3 + $0xc] sm:$0xf] %v214
  %231 = vst [vmem:[%s3 + $0x10] sm:$0xf] %v215
  %232 = vst [vmem:[%s3 + $0x14] sm:$0xf] %v216
  %233 = vst [vmem:[%s3 + $0x18] sm:$0xf] %v217
  %234 = vst [vmem:[%s3 + $0x1c] sm:$0xf] %v218
  %235 = vst [vmem:[%s3 + $0x20] sm:$0xf] %v219
  %236 = vst [vmem:[%s3 + $0x24] sm:$0xf] %v220
  %237 = vst [vmem:[%s3 + $0x28] sm:$0xf] %v221
  %238 = vst [vmem:[%s3 + $0x2c] sm:$0xf] %v222
  %239 = vst [vmem:[%s3 + $0x30] sm:$0xf] %v223
  %240 = vst [vmem:[%s3 + $0x34] sm:$0xf] %v224
  %241 = vst [vmem:[%s3 + $0x38] sm:$0xf] %v225
  %242 = vst [vmem:[%s3 + $0x3c] sm:$0xf] %v226
  // Predicated region
  $region14: #{bottleneck_forward.3} parent=0 // pred_check
    _
  $region15: #{bottleneck_forward.3} parent=0 // pred_check_branch
    %244 = sbr.rel (0) target = $region17
  $region16: #{bottleneck_forward.3} parent=0 // pred_region
    _
  $region17: #{bottleneck_forward.3} parent=0 // pred_fallthru
    _
  // Predicated region
  $region18: #{bottleneck_forward.3} parent=0 // pred_check
    _
  $region19: #{bottleneck_forward.3} parent=0 // pred_check_branch
    %246 = sbr.rel (0) target = $region21
  $region20: #{bottleneck_forward.3} parent=0 // pred_region
    _
  $region21: #{bottleneck_forward.3} parent=0 // pred_fallthru
    _

// kernel: bottleneck_forward.5
$region0: #{bottleneck_forward.5}
  #allocation0 [shape = 'u32[]', space=smem, size = 0x4, offset = 0x4, fixed_abs, tag = 'smem constant byte address 0x4 - core index']
  #allocation1 [shape = 'u32[72,128]{1,0:T(1,128)}', space=vmem, size = 0x9000, scoped, tag = 'internal scratch']
  #allocation2 [shape = 'f32[32,128]{1,0:T(8,128)}', space=vmem, size = 0x4000, scoped, tag = 'scratch operand']
  %s0 = inlined_call_operand.vmem [shape: bf16[32,128], index: 0, kind: input, shape index: {}]
  %s1 = inlined_call_operand.vmem [shape: bf16[128,128], index: 1, kind: input, shape index: {}]
  %s2 = inlined_call_operand.vmem [shape: bf16[32,128], index: 2, kind: input, shape index: {}]
  %s3 = inlined_call_operand.vmem [shape: bf16[128,128], index: 3, kind: input, shape index: {}]
  %s4 = inlined_call_operand.vmem [shape: f32[1,128], index: 4, kind: input, shape index: {}]
  %s5 = inlined_call_operand.hbm [shape: f32[32,128], index: 5, kind: output, shape index: {}]
  %s6 = sld [smem:[#allocation0]]
  $region30: #{bottleneck_forward.5} parent=0
    _
  %s8 = ssub.s32 1, %s6
  %s9 = scalar_select 0, %s8, %s6
  $region1: #{bottleneck_forward.5} parent=0
    #allocation3 [shape = 'u8[16384]{0}', space=vmem, size = 0x4000, scoped, tag = 'output window, operand 0, single buffered']
    #allocation4 [shape = 's32[1]{0}', space=sflag, size = 0x4, scoped, tag = 'scoped memory for bottleneck_forward.5']
    %10 = vsyncpa [#allocation4], 0
    // Predicated region
    $region2: #{bottleneck_forward.5} parent=1 // pred_check
      _
    $region3: #{bottleneck_forward.5} parent=1 // pred_check_branch
      %12 = sbr.rel (0) target = $region5
    $region4: #{bottleneck_forward.5} parent=1 // pred_region
      _
    $region5: #{bottleneck_forward.5} parent=1 // pred_fallthru
      _
    // Predicated region
    $region6: #{bottleneck_forward.5} parent=1 // pred_check
      _
    $region7: #{bottleneck_forward.5} parent=1 // pred_check_branch
      %14 = sbr.rel (0) target = $region9
    $region8: #{bottleneck_forward.5} parent=1 // pred_region
      _
    $region9: #{bottleneck_forward.5} parent=1 // pred_fallthru
      _
    // Predicated region
    $region10: #{bottleneck_forward.5} parent=1 // pred_check
      _
    $region11: #{bottleneck_forward.5} parent=1 // pred_check_branch
      %16 = sbr.rel (0) target = $region13
    $region12: #{bottleneck_forward.5} parent=1 // pred_region
      _
    $region13: #{bottleneck_forward.5} parent=1 // pred_fallthru
      _
    // Predicated region
    $region14: #{bottleneck_forward.5} parent=1 // pred_check
      _
    $region15: #{bottleneck_forward.5} parent=1 // pred_check_branch
      %18 = sbr.rel (0) target = $region17
    $region16: #{bottleneck_forward.5} parent=1 // pred_region
      _
    $region17: #{bottleneck_forward.5} parent=1 // pred_fallthru
      _
    // Predicated region
    $region18: #{bottleneck_forward.5} parent=1 // pred_check
      _
    $region19: #{bottleneck_forward.5} parent=1 // pred_check_branch
      %20 = sbr.rel (0) target = $region21
    $region20: #{bottleneck_forward.5} parent=1 // pred_region
      _
    $region21: #{bottleneck_forward.5} parent=1 // pred_fallthru
      _
    %v21 = vld [vmem:[%s0] sm:$0xf]
    %v22 = vld [vmem:[%s0 + $0x4] sm:$0xf]
    %v23 = vld [vmem:[%s0 + $0x8] sm:$0xf]
    %v24 = vld [vmem:[%s0 + $0xc] sm:$0xf]
    %v25 = vld [vmem:[%s1] sm:$0xf]
    %v26 = vld [vmem:[%s1 + $0x4] sm:$0xf]
    %v27 = vld [vmem:[%s1 + $0x8] sm:$0xf]
    %v28 = vld [vmem:[%s1 + $0xc] sm:$0xf]
    %v29 = vld [vmem:[%s1 + $0x10] sm:$0xf]
    %v30 = vld [vmem:[%s1 + $0x14] sm:$0xf]
    %v31 = vld [vmem:[%s1 + $0x18] sm:$0xf]
    %v32 = vld [vmem:[%s1 + $0x1c] sm:$0xf]
    %v33 = vld [vmem:[%s1 + $0x20] sm:$0xf]
    %v34 = vld [vmem:[%s1 + $0x24] sm:$0xf]
    %v35 = vld [vmem:[%s1 + $0x28] sm:$0xf]
    %v36 = vld [vmem:[%s1 + $0x2c] sm:$0xf]
    %v37 = vld [vmem:[%s1 + $0x30] sm:$0xf]
    %v38 = vld [vmem:[%s1 + $0x34] sm:$0xf]
    %v39 = vld [vmem:[%s1 + $0x38] sm:$0xf]
    %v40 = vld [vmem:[%s1 + $0x3c] sm:$0xf]
    %v45 = vunpack.c.l.b16 %v21
    %v46 = vunpack.c.l.b16 %v22
    %v47 = vunpack.c.l.b16 %v23
    %v48 = vunpack.c.l.b16 %v24
    %v49 = vpack.c.b16 %v46, %v45
    %v50 = vpack.c.b16 %v48, %v47
    %v69 = vunpack.c.l.b16 %v25
    %v70 = vunpack.c.l.b16 %v26
    %v71 = vunpack.c.l.b16 %v27
    %v72 = vunpack.c.l.b16 %v28
    %v73 = vunpack.c.l.b16 %v29
    %v74 = vunpack.c.l.b16 %v30
    %v75 = vunpack.c.l.b16 %v31
    %v76 = vunpack.c.l.b16 %v32
    %v77 = vunpack.c.l.b16 %v33
    %v78 = vunpack.c.l.b16 %v34
    %v79 = vunpack.c.l.b16 %v35
    %v80 = vunpack.c.l.b16 %v36
    %v81 = vunpack.c.l.b16 %v37
    %v82 = vunpack.c.l.b16 %v38
    %v83 = vunpack.c.l.b16 %v39
    %v84 = vunpack.c.l.b16 %v40
    %v85 = vpack.c.b16 %v70, %v69
    %v86 = vpack.c.b16 %v72, %v71
    %v87 = vpack.c.b16 %v74, %v73
    %v88 = vpack.c.b16 %v76, %v75
    %v89 = vpack.c.b16 %v78, %v77
    %v90 = vpack.c.b16 %v80, %v79
    %v91 = vpack.c.b16 %v82, %v81
    %v92 = vpack.c.b16 %v84, %v83
    %101 = vmatpush.bf16.msra.mxu0 %v92
    %102 = vmatpush.bf16.msra.mxu0 %v91
    %103 = vmatpush.bf16.msra.mxu0 %v90
    %104 = vmatpush.bf16.msra.mxu0 %v89
    %105 = vmatpush.bf16.msra.mxu0 %v88
    %106 = vmatpush.bf16.msra.mxu0 %v87
    %107 = vmatpush.bf16.msra.mxu0 %v86
    %108 = vmatpush.bf16.msra.mxu0 %v85
    %109 = vmatmul.bf16.gmra.mxu0 %v49
    %v110 = vpop.f32.mrf.mxu0
    %v111 = vadd.f32 0.0, %v110
    %v112 = vpop.f32.mrf.mxu0
    %v113 = vadd.f32 0.0, %v112
    %114 = vmatmul.bf16.gmra.mxu0 %v50
    %v115 = vpop.f32.mrf.mxu0
    %v116 = vadd.f32 0.0, %v115
    %v117 = vpop.f32.mrf.mxu0
    %v118 = vadd.f32 0.0, %v117
    %119 = vdwg.mxu0
    %120 = vst [vmem:[#allocation2] sm:$0xff] %v111
    %121 = vst [vmem:[#allocation2 + $0x8] sm:$0xff] %v113
    %122 = vst [vmem:[#allocation2 + $0x10] sm:$0xff] %v116
    %123 = vst [vmem:[#allocation2 + $0x18] sm:$0xff] %v118
    %v124 = vld [vmem:[#allocation2] sm:$0xff]
    %v125 = vld [vmem:[#allocation2 + $0x8] sm:$0xff]
    %v126 = vld [vmem:[#allocation2 + $0x10] sm:$0xff]
    %v127 = vld [vmem:[#allocation2 + $0x18] sm:$0xff]
    %v128 = vld [vmem:[%s2] sm:$0xf]
    %v129 = vld [vmem:[%s2 + $0x4] sm:$0xf]
    %v130 = vld [vmem:[%s2 + $0x8] sm:$0xf]
    %v131 = vld [vmem:[%s2 + $0xc] sm:$0xf]
    %v132 = vld [vmem:[%s3] sm:$0xf]
    %v133 = vld [vmem:[%s3 + $0x4] sm:$0xf]
    %v134 = vld [vmem:[%s3 + $0x8] sm:$0xf]
    %v135 = vld [vmem:[%s3 + $0xc] sm:$0xf]
    %v136 = vld [vmem:[%s3 + $0x10] sm:$0xf]
    %v137 = vld [vmem:[%s3 + $0x14] sm:$0xf]
    %v138 = vld [vmem:[%s3 + $0x18] sm:$0xf]
    %v139 = vld [vmem:[%s3 + $0x1c] sm:$0xf]
    %v140 = vld [vmem:[%s3 + $0x20] sm:$0xf]
    %v141 = vld [vmem:[%s3 + $0x24] sm:$0xf]
    %v142 = vld [vmem:[%s3 + $0x28] sm:$0xf]
    %v143 = vld [vmem:[%s3 + $0x2c] sm:$0xf]
    %v144 = vld [vmem:[%s3 + $0x30] sm:$0xf]
    %v145 = vld [vmem:[%s3 + $0x34] sm:$0xf]
    %v146 = vld [vmem:[%s3 + $0x38] sm:$0xf]
    %v147 = vld [vmem:[%s3 + $0x3c] sm:$0xf]
    %v152 = vunpack.c.l.b16 %v128
    %v153 = vunpack.c.l.b16 %v129
    %v154 = vunpack.c.l.b16 %v130
    %v155 = vunpack.c.l.b16 %v131
    %v156 = vpack.c.b16 %v153, %v152
    %v157 = vpack.c.b16 %v155, %v154
    %v176 = vunpack.c.l.b16 %v132
    %v177 = vunpack.c.l.b16 %v133
    %v178 = vunpack.c.l.b16 %v134
    %v179 = vunpack.c.l.b16 %v135
    %v180 = vunpack.c.l.b16 %v136
    %v181 = vunpack.c.l.b16 %v137
    %v182 = vunpack.c.l.b16 %v138
    %v183 = vunpack.c.l.b16 %v139
    %v184 = vunpack.c.l.b16 %v140
    %v185 = vunpack.c.l.b16 %v141
    %v186 = vunpack.c.l.b16 %v142
    %v187 = vunpack.c.l.b16 %v143
    %v188 = vunpack.c.l.b16 %v144
    %v189 = vunpack.c.l.b16 %v145
    %v190 = vunpack.c.l.b16 %v146
    %v191 = vunpack.c.l.b16 %v147
    %v192 = vpack.c.b16 %v177, %v176
    %v193 = vpack.c.b16 %v179, %v178
    %v194 = vpack.c.b16 %v181, %v180
    %v195 = vpack.c.b16 %v183, %v182
    %v196 = vpack.c.b16 %v185, %v184
    %v197 = vpack.c.b16 %v187, %v186
    %v198 = vpack.c.b16 %v189, %v188
    %v199 = vpack.c.b16 %v191, %v190
    %208 = vmatpush.bf16.msra.mxu0 %v199
    %209 = vmatpush.bf16.msra.mxu0 %v198
    %210 = vmatpush.bf16.msra.mxu0 %v197
    %211 = vmatpush.bf16.msra.mxu0 %v196
    %212 = vmatpush.bf16.msra.mxu0 %v195
    %213 = vmatpush.bf16.msra.mxu0 %v194
    %214 = vmatpush.bf16.msra.mxu0 %v193
    %215 = vmatpush.bf16.msra.mxu0 %v192
    %216 = vmatmul.bf16.gmra.mxu0 %v156
    %v217 = vpop.f32.mrf.mxu0
    %v218 = vadd.f32 0.0, %v217
    %v219 = vpop.f32.mrf.mxu0
    %v220 = vadd.f32 0.0, %v219
    %221 = vmatmul.bf16.gmra.mxu0 %v157
    %v222 = vpop.f32.mrf.mxu0
    %v223 = vadd.f32 0.0, %v222
    %v224 = vpop.f32.mrf.mxu0
    %v225 = vadd.f32 0.0, %v224
    %226 = vdwg.mxu0
    %v227 = vadd.f32 %v124, %v218
    %v228 = vadd.f32 %v125, %v220
    %v229 = vadd.f32 %v126, %v223
    %v230 = vadd.f32 %v127, %v225
    %231 = vst [vmem:[#allocation2] sm:$0xff] %v227
    %232 = vst [vmem:[#allocation2 + $0x8] sm:$0xff] %v228
    %233 = vst [vmem:[#allocation2 + $0x10] sm:$0xff] %v229
    %234 = vst [vmem:[#allocation2 + $0x18] sm:$0xff] %v230
    %v235 = vld [vmem:[#allocation2] sm:$0xff]
    %v236 = vld [vmem:[#allocation2 + $0x8] sm:$0xff]
    %v237 = vld [vmem:[#allocation2 + $0x10] sm:$0xff]
    %v238 = vld [vmem:[#allocation2 + $0x18] sm:$0xff]
    %v239 = vld [vmem:[%s4] sm:$0x1]
    %v241 = vperm.slane %v239, 0
    %v243 = vadd.f32 %v235, %v241
    %v244 = vadd.f32 %v236, %v241
    %v245 = vadd.f32 %v237, %v241
    %v246 = vadd.f32 %v238, %v241
    %v247 = vmax.f32 %v243, 0.0
    %v248 = vmax.f32 %v244, 0.0
    %v249 = vmax.f32 %v245, 0.0
    %v250 = vmax.f32 %v246, 0.0
    %251 = vst [vmem:[#allocation3] sm:$0xff] %v247
    %252 = vst [vmem:[#allocation3 + $0x8] sm:$0xff] %v248
    %253 = vst [vmem:[#allocation3 + $0x10] sm:$0xff] %v249
    %254 = vst [vmem:[#allocation3 + $0x18] sm:$0xff] %v250
    // Predicated region
    $region22: #{bottleneck_forward.5} parent=1 // pred_check
      _
    $region23: #{bottleneck_forward.5} parent=1 // pred_check_branch
      %256 = sbr.rel (0) target = $region25
    $region24: #{bottleneck_forward.5} parent=1 // pred_region
      %258 = vsyncadd [#allocation4], 0
      %s259 = sshll.u32 [#allocation3], 4
      %s260 = int_to_ptr.vmem [resolvable:$true] %s259
      %s261 = sshll.u32 %s5, 4
      %s262 = int_to_ptr.hbm [resolvable:$true] %s261
      %267 = dma.vmem_to_hbm [thread:$0]  %s260, 512, %s262, [#allocation4], 128, 128, 8
    $region25: #{bottleneck_forward.5} parent=1 // pred_fallthru
      _
    // Predicated region
    $region26: #{bottleneck_forward.5} parent=1 // pred_check
      _
    $region27: #{bottleneck_forward.5} parent=1 // pred_check_branch
      %269 = sbr.rel (0) target = $region29
    $region28: #{bottleneck_forward.5} parent=1 // pred_region
      %271 = dma.done [#allocation4], 512
    $region29: #{bottleneck_forward.5} parent=1 // pred_fallthru
      _
    %272 = vsyncpa [#allocation4], 1

// kernel: bottleneck_forward.4
$region0: #{bottleneck_forward.4}
  #allocation0 [shape = 'u32[]', space=smem, size = 0x4, offset = 0x4, fixed_abs, tag = 'smem constant byte address 0x4 - core index']
  #allocation1 [shape = 'u32[72,128]{1,0:T(1,128)}', space=vmem, size = 0x9000, scoped, tag = 'internal scratch']
  #allocation2 [shape = 'f32[32,128]{1,0:T(8,128)}', space=vmem, size = 0x4000, scoped, tag = 'scratch operand']
  %s0 = inlined_call_operand.vmem [shape: bf16[2,5,4,9,128], index: 0, kind: input, shape index: {}]
  %s1 = inlined_call_operand.vmem [shape: bf16[9,128,128], index: 1, kind: input, shape index: {}]
  %s2 = inlined_call_operand.vmem [shape: f32[1,128], index: 2, kind: input, shape index: {}]
  %s3 = inlined_call_operand.vmem [shape: bf16[2,32,128], index: 3, kind: output, shape index: {}]
  %s4 = sld [smem:[#allocation0]]
  $region45: #{bottleneck_forward.4} parent=0
    _
  %s6 = ssub.s32 1, %s4
  %s7 = scalar_select 0, %s6, %s4
  loop: start=0, step=1, limit=4
  $region2: #{bottleneck_forward.4} parent=0 // loop_pre_header
    _
  $region3: #{bottleneck_forward.4} parent=0 // loop_header
    %s9 = sphi 0, %s13
    %p10 = scmp.ge.s32.totalorder %s9, 4
    %s19 = sphi 0, %s21
    %s22 = sphi 0, %s19
    %s23 = sphi 0, %s22
    %s39 = sphi 0, %s23
    %s43 = sphi 0, %s43
    %s45 = sphi 0, %s43
    %s46 = sphi 0, %s45
    %s60 = sphi 0, %s46
    %s64 = sphi 0, %s64
    %s66 = sphi 0, %s64
    %s67 = sphi 0, %s66
    %s81 = sphi 0, %s67
    %s87 = sphi 0, %s89
    %s90 = sphi 0, %s87
    %s91 = sphi 0, %s90
    %s107 = sphi 0, %s91
  $region4: #{bottleneck_forward.4} parent=0 // loop_header_branch
    %12 = sbr.rel (%p10) target = $region8
  $region5: #{bottleneck_forward.4} parent=0 // loop_body
    %s14 = ssub.s32 %s9, 1
    %s15 = ssub.s32 %s9, 2
    %s16 = sadd.s32 %s9, 1
    %s17 = ssub.s32 %s9, %s16
    %p18 = scmp.eq.s32.totalorder %s17, 0
    %s20 = sadd.s32 %s19, 1
    %s21 = scalar_select %p18, %s19, %s20
    %p24 = pneg %p18
    %p25 = scmp.eq.s32.totalorder %s9, 1
    %p26 = por %p24, %p25
    %p27 = scmp.ne.s32.totalorder %s19, %s22
    %p28 = scmp.eq.s32.totalorder %s9, 0
    %p29 = por %p27, %p28
    %p30 = scmp.ne.s32.totalorder %s19, %s22
    %p31 = scmp.eq.s32.totalorder %s14, 1
    %p32 = por %p30, %p31
    %p33 = scmp.ne.s32.totalorder %s22, %s23
    %p34 = scmp.eq.s32.totalorder %s14, 0
    %p35 = por %p33, %p34
    %p36 = scmp.ne.s32.totalorder %s22, %s23
    %p37 = scmp.eq.s32.totalorder %s15, 1
    %p38 = por %p36, %p37
    %p40 = scmp.ne.s32.totalorder %s23, %s39
    %p41 = scmp.eq.s32.totalorder %s15, 0
    %p42 = por %p40, %p41
    %s44 = sadd.s32 %s43, 1
    %p47 = scmp.eq.s32.totalorder %s9, 1
    %p48 = scmp.ne.s32.totalorder %s43, %s45
    %p49 = scmp.eq.s32.totalorder %s9, 0
    %p50 = por %p48, %p49
    %p51 = scmp.ne.s32.totalorder %s43, %s45
    %p52 = scmp.eq.s32.totalorder %s14, 1
    %p53 = por %p51, %p52
    %p54 = scmp.ne.s32.totalorder %s45, %s46
    %p55 = scmp.eq.s32.totalorder %s14, 0
    %p56 = por %p54, %p55
    %p57 = scmp.ne.s32.totalorder %s45, %s46
    %p58 = scmp.eq.s32.totalorder %s15, 1
    %p59 = por %p57, %p58
    %p61 = scmp.ne.s32.totalorder %s46, %s60
    %p62 = scmp.eq.s32.totalorder %s15, 0
    %p63 = por %p61, %p62
    %s65 = sadd.s32 %s64, 1
    %p68 = scmp.eq.s32.totalorder %s9, 1
    %p69 = scmp.ne.s32.totalorder %s64, %s66
    %p70 = scmp.eq.s32.totalorder %s9, 0
    %p71 = por %p69, %p70
    %p72 = scmp.ne.s32.totalorder %s64, %s66
    %p73 = scmp.eq.s32.totalorder %s14, 1
    %p74 = por %p72, %p73
    %p75 = scmp.ne.s32.totalorder %s66, %s67
    %p76 = scmp.eq.s32.totalorder %s14, 0
    %p77 = por %p75, %p76
    %p78 = scmp.ne.s32.totalorder %s66, %s67
    %p79 = scmp.eq.s32.totalorder %s15, 1
    %p80 = por %p78, %p79
    %p82 = scmp.ne.s32.totalorder %s67, %s81
    %p83 = scmp.eq.s32.totalorder %s15, 0
    %p84 = por %p82, %p83
    %s85 = ssub.s32 %s9, %s16
    %p86 = scmp.eq.s32.totalorder %s85, 0
    %s88 = sadd.s32 %s87, 1
    %s89 = scalar_select %p86, %s87, %s88
    %p92 = pneg %p86
    %p93 = scmp.eq.s32.totalorder %s9, 1
    %p94 = por %p92, %p93
    %p95 = scmp.ne.s32.totalorder %s87, %s90
    %p96 = scmp.eq.s32.totalorder %s9, 0
    %p97 = por %p95, %p96
    %p98 = scmp.ne.s32.totalorder %s87, %s90
    %p99 = scmp.eq.s32.totalorder %s14, 1
    %p100 = por %p98, %p99
    %p101 = scmp.ne.s32.totalorder %s90, %s91
    %p102 = scmp.eq.s32.totalorder %s14, 0
    %p103 = por %p101, %p102
    %p104 = scmp.ne.s32.totalorder %s90, %s91
    %p105 = scmp.eq.s32.totalorder %s15, 1
    %p106 = por %p104, %p105
    %p108 = scmp.ne.s32.totalorder %s91, %s107
    %p109 = scmp.eq.s32.totalorder %s15, 0
    %p110 = por %p108, %p109
    %p111 = scmp.le.s32.totalorder 1, %s9
    %p112 = scmp.lt.s32.totalorder %s9, 3
    %p113 = pnand %p111, %p112
    %p114 = pneg %p113
    // Predicated region
    $region9: #{bottleneck_forward.4} parent=5 // pred_check
      _
    $region10: #{bottleneck_forward.4} parent=5 // pred_check_branch
      %116 = sbr.rel (%p113) target = $region12
    $region11: #{bottleneck_forward.4} parent=5 // pred_region
      %s117 = ssub.s32 %s9, 1
      // Predicated region
      $region13: #{bottleneck_forward.4} parent=11 // pred_check
        %p118 = pneg %p56
      $region14: #{bottleneck_forward.4} parent=11 // pred_check_branch
        %120 = sbr.rel (%p118) target = $region16
      $region15: #{bottleneck_forward.4} parent=11 // pred_region
        _
      $region16: #{bottleneck_forward.4} parent=11 // pred_fallthru
        _
      // Predicated region
      $region17: #{bottleneck_forward.4} parent=11 // pred_check
        %p121 = pneg %p77
      $region18: #{bottleneck_forward.4} parent=11 // pred_check_branch
        %123 = sbr.rel (%p121) target = $region20
      $region19: #{bottleneck_forward.4} parent=11 // pred_region
        _
      $region20: #{bottleneck_forward.4} parent=11 // pred_fallthru
        _
    $region12: #{bottleneck_forward.4} parent=5 // pred_fallthru
      _
    %p124 = scmp.lt.s32.totalorder %s9, 2
    // Predicated region
    $region21: #{bottleneck_forward.4} parent=5 // pred_check
      %p125 = pneg %p124
    $region22: #{bottleneck_forward.4} parent=5 // pred_check_branch
      %127 = sbr.rel (%p125) target = $region24
    $region23: #{bottleneck_forward.4} parent=5 // pred_region
      // Predicated region
      $region25: #{bottleneck_forward.4} parent=23 // pred_check
        %p128 = pneg %p29
      $region26: #{bottleneck_forward.4} parent=23 // pred_check_branch
        %130 = sbr.rel (%p128) target = $region28
      $region27: #{bottleneck_forward.4} parent=23 // pred_region
        %p131 = scmp.lt.s32.totalorder %s9, 1
        %s132 = scalar_select %p131, %s9, 1
        %s133 = smul.addr %s132, 40
        %s134 = smul.addr %s133, 4
        %s135 = scalar_lea.vmem %s0, %s134
      $region28: #{bottleneck_forward.4} parent=23 // pred_fallthru
        _
    $region24: #{bottleneck_forward.4} parent=5 // pred_fallthru
      _
    %p136 = scmp.le.s32.totalorder 1, %s9
    %p137 = scmp.lt.s32.totalorder %s9, 3
    %p138 = pnand %p136, %p137
    %p139 = pneg %p138
    // Predicated region
    $region29: #{bottleneck_forward.4} parent=5 // pred_check
      _
    $region30: #{bottleneck_forward.4} parent=5 // pred_check_branch
      %141 = sbr.rel (%p138) target = $region32
    $region31: #{bottleneck_forward.4} parent=5 // pred_region
      %s142 = ssub.s32 %s9, 1
      %p143 = scmp.lt.s32.totalorder %s14, 1
      %s144 = scalar_select %p143, %s14, 1
      %s145 = smul.addr %s144, 40
      %s146 = smul.addr %s145, 4
      %s147 = scalar_lea.vmem %s0, %s146
      %p148 = pneg %p35
      %p149 = pneg %p32
      %p150 = pneg %p56
      %p151 = pneg %p53
      %p152 = pneg %p77
      %p153 = pneg %p74
      %p154 = pneg %p103
      %p155 = pneg %p100
      %p156 = scmp.lt.s32.totalorder %s14, 1
      %s157 = scalar_select %p156, %s14, 1
      %s158 = smul.addr %s157, 4
      %s159 = smul.addr %s158, 4
      %s160 = scalar_lea.vmem %s3, %s159
      %p161 = scmp.lt.s32.totalorder %s14, 1
      %s162 = scalar_select %p161, %s14, 1
      %s163 = smul.addr %s162, 40
      %s164 = smul.addr %s163, 4
      %s165 = scalar_lea.vmem %s0, %s164
      %p166 = scmp.lt.s32.totalorder %s14, 1
      %s167 = scalar_select %p166, %s14, 1
      %s168 = smul.addr %s167, 4
      %s169 = smul.addr %s168, 4
      %s170 = scalar_lea.vmem %s3, %s169
      %v171 = vld [vmem:[%s165] sm:$0xf]
      %v172 = vld [vmem:[%s165 + $0x20] sm:$0xf]
      %v173 = vld [vmem:[%s165 + $0x40] sm:$0xf]
      %v174 = vld [vmem:[%s165 + $0x60] sm:$0xf]
      %v175 = vld [vmem:[%s1] sm:$0xf]
      %v176 = vld [vmem:[%s1 + $0x4] sm:$0xf]
      %v177 = vld [vmem:[%s1 + $0x8] sm:$0xf]
      %v178 = vld [vmem:[%s1 + $0xc] sm:$0xf]
      %v179 = vld [vmem:[%s1 + $0x10] sm:$0xf]
      %v180 = vld [vmem:[%s1 + $0x14] sm:$0xf]
      %v181 = vld [vmem:[%s1 + $0x18] sm:$0xf]
      %v182 = vld [vmem:[%s1 + $0x1c] sm:$0xf]
      %v183 = vld [vmem:[%s1 + $0x20] sm:$0xf]
      %v184 = vld [vmem:[%s1 + $0x24] sm:$0xf]
      %v185 = vld [vmem:[%s1 + $0x28] sm:$0xf]
      %v186 = vld [vmem:[%s1 + $0x2c] sm:$0xf]
      %v187 = vld [vmem:[%s1 + $0x30] sm:$0xf]
      %v188 = vld [vmem:[%s1 + $0x34] sm:$0xf]
      %v189 = vld [vmem:[%s1 + $0x38] sm:$0xf]
      %v190 = vld [vmem:[%s1 + $0x3c] sm:$0xf]
      %v195 = vunpack.c.l.b16 %v171
      %v196 = vunpack.c.l.b16 %v172
      %v197 = vunpack.c.l.b16 %v173
      %v198 = vunpack.c.l.b16 %v174
      %v199 = vpack.c.b16 %v196, %v195
      %v200 = vpack.c.b16 %v198, %v197
      %v219 = vunpack.c.l.b16 %v175
      %v220 = vunpack.c.l.b16 %v176
      %v221 = vunpack.c.l.b16 %v177
      %v222 = vunpack.c.l.b16 %v178
      %v223 = vunpack.c.l.b16 %v179
      %v224 = vunpack.c.l.b16 %v180
      %v225 = vunpack.c.l.b16 %v181
      %v226 = vunpack.c.l.b16 %v182
      %v227 = vunpack.c.l.b16 %v183
      %v228 = vunpack.c.l.b16 %v184
      %v229 = vunpack.c.l.b16 %v185
      %v230 = vunpack.c.l.b16 %v186
      %v231 = vunpack.c.l.b16 %v187
      %v232 = vunpack.c.l.b16 %v188
      %v233 = vunpack.c.l.b16 %v189
      %v234 = vunpack.c.l.b16 %v190
      %v235 = vpack.c.b16 %v220, %v219
      %v236 = vpack.c.b16 %v222, %v221
      %v237 = vpack.c.b16 %v224, %v223
      %v238 = vpack.c.b16 %v226, %v225
      %v239 = vpack.c.b16 %v228, %v227
      %v240 = vpack.c.b16 %v230, %v229
      %v241 = vpack.c.b16 %v232, %v231
      %v242 = vpack.c.b16 %v234, %v233
      %251 = vmatpush.bf16.msra.mxu0 %v242
      %252 = vmatpush.bf16.msra.mxu0 %v241
      %253 = vmatpush.bf16.msra.mxu0 %v240
      %254 = vmatpush.bf16.msra.mxu0 %v239
      %255 = vmatpush.bf16.msra.mxu0 %v238
      %256 = vmatpush.bf16.msra.mxu0 %v237
      %257 = vmatpush.bf16.msra.mxu0 %v236
      %258 = vmatpush.bf16.msra.mxu0 %v235
      %259 = vmatmul.bf16.gmra.mxu0 %v199
      %v260 = vpop.f32.mrf.mxu0
      %v261 = vadd.f32 0.0, %v260
      %v262 = vpop.f32.mrf.mxu0
      %v263 = vadd.f32 0.0, %v262
      %264 = vmatmul.bf16.gmra.mxu0 %v200
      %v265 = vpop.f32.mrf.mxu0
      %v266 = vadd.f32 0.0, %v265
      %v267 = vpop.f32.mrf.mxu0
      %v268 = vadd.f32 0.0, %v267
      %269 = vdwg.mxu0
      %270 = vst [vmem:[#allocation2] sm:$0xff] %v261
      %271 = vst [vmem:[#allocation2 + $0x8] sm:$0xff] %v263
      %272 = vst [vmem:[#allocation2 + $0x10] sm:$0xff] %v266
      %273 = vst [vmem:[#allocation2 + $0x18] sm:$0xff] %v268
      %s274 = scalar_lea.vmem %s165, 8
      %v275 = vld [vmem:[%s274] sm:$0xf]
      %v276 = vld [vmem:[%s274 + $0x20] sm:$0xf]
      %v277 = vld [vmem:[%s274 + $0x40] sm:$0xf]
      %v278 = vld [vmem:[%s274 + $0x60] sm:$0xf]
      %s279 = scalar_lea.vmem %s1, 64
      %v280 = vld [vmem:[%s279] sm:$0xf]
      %v281 = vld [vmem:[%s279 + $0x4] sm:$0xf]
      %v282 = vld [vmem:[%s279 + $0x8] sm:$0xf]
      %v283 = vld [vmem:[%s279 + $0xc] sm:$0xf]
      %v284 = vld [vmem:[%s279 + $0x10] sm:$0xf]
      %v285 = vld [vmem:[%s279 + $0x14] sm:$0xf]
      %v286 = vld [vmem:[%s279 + $0x18] sm:$0xf]
      %v287 = vld [vmem:[%s279 + $0x1c] sm:$0xf]
      %v288 = vld [vmem:[%s279 + $0x20] sm:$0xf]
      %v289 = vld [vmem:[%s279 + $0x24] sm:$0xf]
      %v290 = vld [vmem:[%s279 + $0x28] sm:$0xf]
      %v291 = vld [vmem:[%s279 + $0x2c] sm:$0xf]
      %v292 = vld [vmem:[%s279 + $0x30] sm:$0xf]
      %v293 = vld [vmem:[%s279 + $0x34] sm:$0xf]
      %v294 = vld [vmem:[%s279 + $0x38] sm:$0xf]
      %v295 = vld [vmem:[%s279 + $0x3c] sm:$0xf]
      %v300 = vunpack.c.l.b16 %v275
      %v301 = vunpack.c.l.b16 %v276
      %v302 = vunpack.c.l.b16 %v277
      %v303 = vunpack.c.l.b16 %v278
      %v304 = vpack.c.b16 %v301, %v300
      %v305 = vpack.c.b16 %v303, %v302
      %v324 = vunpack.c.l.b16 %v280
      %v325 = vunpack.c.l.b16 %v281
      %v326 = vunpack.c.l.b16 %v282
      %v327 = vunpack.c.l.b16 %v283
      %v328 = vunpack.c.l.b16 %v284
      %v329 = vunpack.c.l.b16 %v285
      %v330 = vunpack.c.l.b16 %v286
      %v331 = vunpack.c.l.b16 %v287
      %v332 = vunpack.c.l.b16 %v288
      %v333 = vunpack.c.l.b16 %v289
      %v334 = vunpack.c.l.b16 %v290
      %v335 = vunpack.c.l.b16 %v291
      %v336 = vunpack.c.l.b16 %v292
      %v337 = vunpack.c.l.b16 %v293
      %v338 = vunpack.c.l.b16 %v294
      %v339 = vunpack.c.l.b16 %v295
      %v340 = vpack.c.b16 %v325, %v324
      %v341 = vpack.c.b16 %v327, %v326
      %v342 = vpack.c.b16 %v329, %v328
      %v343 = vpack.c.b16 %v331, %v330
      %v344 = vpack.c.b16 %v333, %v332
      %v345 = vpack.c.b16 %v335, %v334
      %v346 = vpack.c.b16 %v337, %v336
      %v347 = vpack.c.b16 %v339, %v338
      %356 = vmatpush.bf16.msra.mxu0 %v347
      %357 = vmatpush.bf16.msra.mxu0 %v346
      %358 = vmatpush.bf16.msra.mxu0 %v345
      %359 = vmatpush.bf16.msra.mxu0 %v344
      %360 = vmatpush.bf16.msra.mxu0 %v343
      %361 = vmatpush.bf16.msra.mxu0 %v342
      %362 = vmatpush.bf16.msra.mxu0 %v341
      %363 = vmatpush.bf16.msra.mxu0 %v340
      %364 = vmatmul.bf16.gmra.mxu0 %v304
      %v365 = vpop.f32.mrf.mxu0
      %v366 = vadd.f32 0.0, %v365
      %v367 = vpop.f32.mrf.mxu0
      %v368 = vadd.f32 0.0, %v367
      %369 = vmatmul.bf16.gmra.mxu0 %v305
      %v370 = vpop.f32.mrf.mxu0
      %v371 = vadd.f32 0.0, %v370
      %v372 = vpop.f32.mrf.mxu0
      %v373 = vadd.f32 0.0, %v372
      %374 = vdwg.mxu0
      %v375 = vld [vmem:[#allocation2] sm:$0xff]
      %v376 = vld [vmem:[#allocation2 + $0x8] sm:$0xff]
      %v377 = vld [vmem:[#allocation2 + $0x10] sm:$0xff]
      %v378 = vld [vmem:[#allocation2 + $0x18] sm:$0xff]
      %v379 = vadd.f32 %v375, %v366
      %v380 = vadd.f32 %v376, %v368
      %v381 = vadd.f32 %v377, %v371
      %v382 = vadd.f32 %v378, %v373
      %383 = vst [vmem:[#allocation2] sm:$0xff] %v379
      %384 = vst [vmem:[#allocation2 + $0x8] sm:$0xff] %v380
      %385 = vst [vmem:[#allocation2 + $0x10] sm:$0xff] %v381
      %386 = vst [vmem:[#allocation2 + $0x18] sm:$0xff] %v382
      %v387 = vld [vmem:[%s165] sm:$0xf]
      %v388 = vld [vmem:[%s165 + $0x4] sm:$0x1]
      %v389 = vld [vmem:[%s165 + $0x20] sm:$0xf]
      %v390 = vld [vmem:[%s165 + $0x24] sm:$0x1]
      %v391 = vld [vmem:[%s165 + $0x40] sm:$0xf]
      %v392 = vld [vmem:[%s165 + $0x44] sm:$0x1]
      %v393 = vld [vmem:[%s165 + $0x60] sm:$0xf]
      %v394 = vld [vmem:[%s165 + $0x64] sm:$0x1]
      %vm395 = vsmask.f32 3328
      %vm396 = vsmask.f32 7440
      %vm397 = vmor %vm395, %vm396
      %v399 = vshrl.u32 %v387, 16
      %v401 = vrot.slane %v399, 4
      %v402 = vshll.u32 %v387, 16
      %v404 = vrot.slane %v402, 5
      %v405 = vor.u32 %v401, %v404
      %v406 = vrot.slane %v405, 4
      %v408 = vshll.u32 %v388, 16
      %v410 = vrot.slane %v408, 5
      %v411 = vsel %vm397, %v406, %v410
      %v413 = vshrl.u32 %v389, 16
      %v415 = vrot.slane %v413, 4
      %v416 = vshll.u32 %v389, 16
      %v418 = vrot.slane %v416, 5
      %v419 = vor.u32 %v415, %v418
      %v420 = vrot.slane %v419, 4
      %v422 = vshll.u32 %v390, 16
      %v424 = vrot.slane %v422, 5
      %v425 = vsel %vm397, %v420, %v424
      %v427 = vshrl.u32 %v391, 16
      %v429 = vrot.slane %v427, 4
      %v430 = vshll.u32 %v391, 16
      %v432 = vrot.slane %v430, 5
      %v433 = vor.u32 %v429, %v432
      %v434 = vrot.slane %v433, 4
      %v436 = vshll.u32 %v392, 16
      %v438 = vrot.slane %v436, 5
      %v439 = vsel %vm397, %v434, %v438
      %v441 = vshrl.u32 %v393, 16
      %v443 = vrot.slane %v441, 4
      %v444 = vshll.u32 %v393, 16
      %v446 = vrot.slane %v444, 5
      %v447 = vor.u32 %v443, %v446
      %v448 = vrot.slane %v447, 4
      %v450 = vshll.u32 %v394, 16
      %v452 = vrot.slane %v450, 5
      %v453 = vsel %vm397, %v448, %v452
      %s454 = scalar_lea.vmem %s1, 128
      %v455 = vld [vmem:[%s454] sm:$0xf]
      %v456 = vld [vmem:[%s454 + $0x4] sm:$0xf]
      %v457 = vld [vmem:[%s454 + $0x8] sm:$0xf]
      %v458 = vld [vmem:[%s454 + $0xc] sm:$0xf]
      %v459 = vld [vmem:[%s454 + $0x10] sm:$0xf]
      %v460 = vld [vmem:[%s454 + $0x14] sm:$0xf]
      %v461 = vld [vmem:[%s454 + $0x18] sm:$0xf]
      %v462 = vld [vmem:[%s454 + $0x1c] sm:$0xf]
      %v463 = vld [vmem:[%s454 + $0x20] sm:$0xf]
      %v464 = vld [vmem:[%s454 + $0x24] sm:$0xf]
      %v465 = vld [vmem:[%s454 + $0x28] sm:$0xf]
      %v466 = vld [vmem:[%s454 + $0x2c] sm:$0xf]
      %v467 = vld [vmem:[%s454 + $0x30] sm:$0xf]
      %v468 = vld [vmem:[%s454 + $0x34] sm:$0xf]
      %v469 = vld [vmem:[%s454 + $0x38] sm:$0xf]
      %v470 = vld [vmem:[%s454 + $0x3c] sm:$0xf]
      %v471 = vunpack.c.l.b16 %v411
      %v472 = vunpack.c.l.b16 %v425
      %v473 = vunpack.c.l.b16 %v439
      %v474 = vunpack.c.l.b16 %v453
      %v475 = vpack.c.b16 %v472, %v471
      %v476 = vpack.c.b16 %v474, %v473
      %v495 = vunpack.c.l.b16 %v455
      %v496 = vunpack.c.l.b16 %v456
      %v497 = vunpack.c.l.b16 %v457
      %v498 = vunpack.c.l.b16 %v458
      %v499 = vunpack.c.l.b16 %v459
      %v500 = vunpack.c.l.b16 %v460
      %v501 = vunpack.c.l.b16 %v461
      %v502 = vunpack.c.l.b16 %v462
      %v503 = vunpack.c.l.b16 %v463
      %v504 = vunpack.c.l.b16 %v464
      %v505 = vunpack.c.l.b16 %v465
      %v506 = vunpack.c.l.b16 %v466
      %v507 = vunpack.c.l.b16 %v467
      %v508 = vunpack.c.l.b16 %v468
      %v509 = vunpack.c.l.b16 %v469
      %v510 = vunpack.c.l.b16 %v470
      %v511 = vpack.c.b16 %v496, %v495
      %v512 = vpack.c.b16 %v498, %v497
      %v513 = vpack.c.b16 %v500, %v499
      %v514 = vpack.c.b16 %v502, %v501
      %v515 = vpack.c.b16 %v504, %v503
      %v516 = vpack.c.b16 %v506, %v505
      %v517 = vpack.c.b16 %v508, %v507
      %v518 = vpack.c.b16 %v510, %v509
      %527 = vmatpush.bf16.msra.mxu0 %v518
      %528 = vmatpush.bf16.msra.mxu0 %v517
      %529 = vmatpush.bf16.msra.mxu0 %v516
      %530 = vmatpush.bf16.msra.mxu0 %v515
      %531 = vmatpush.bf16.msra.mxu0 %v514
      %532 = vmatpush.bf16.msra.mxu0 %v513
      %533 = vmatpush.bf16.msra.mxu0 %v512
      %534 = vmatpush.bf16.msra.mxu0 %v511
      %535 = vmatmul.bf16.gmra.mxu0 %v475
      %v536 = vpop.f32.mrf.mxu0
      %v537 = vadd.f32 0.0, %v536
      %v538 = vpop.f32.mrf.mxu0
      %v539 = vadd.f32 0.0, %v538
      %540 = vmatmul.bf16.gmra.mxu0 %v476
      %v541 = vpop.f32.mrf.mxu0
      %v542 = vadd.f32 0.0, %v541
      %v543 = vpop.f32.mrf.mxu0
      %v544 = vadd.f32 0.0, %v543
      %545 = vdwg.mxu0
      %v546 = vld [vmem:[#allocation2] sm:$0xff]
      %v547 = vld [vmem:[#allocation2 + $0x8] sm:$0xff]
      %v548 = vld [vmem:[#allocation2 + $0x10] sm:$0xff]
      %v549 = vld [vmem:[#allocation2 + $0x18] sm:$0xff]
      %v550 = vadd.f32 %v546, %v537
      %v551 = vadd.f32 %v547, %v539
      %v552 = vadd.f32 %v548, %v542
      %v553 = vadd.f32 %v549, %v544
      %554 = vst [vmem:[#allocation2] sm:$0xff] %v550
      %555 = vst [vmem:[#allocation2 + $0x8] sm:$0xff] %v551
      %556 = vst [vmem:[#allocation2 + $0x10] sm:$0xff] %v552
      %557 = vst [vmem:[#allocation2 + $0x18] sm:$0xff] %v553
      %s558 = scalar_lea.vmem %s165, 16
      %v559 = vld [vmem:[%s558] sm:$0xf]
      %v560 = vld [vmem:[%s558 + $0x20] sm:$0xf]
      %v561 = vld [vmem:[%s558 + $0x40] sm:$0xf]
      %v562 = vld [vmem:[%s558 + $0x60] sm:$0xf]
      %s563 = scalar_lea.vmem %s1, 192
      %v564 = vld [vmem:[%s563] sm:$0xf]
      %v565 = vld [vmem:[%s563 + $0x4] sm:$0xf]
      %v566 = vld [vmem:[%s563 + $0x8] sm:$0xf]
      %v567 = vld [vmem:[%s563 + $0xc] sm:$0xf]
      %v568 = vld [vmem:[%s563 + $0x10] sm:$0xf]
      %v569 = vld [vmem:[%s563 + $0x14] sm:$0xf]
      %v570 = vld [vmem:[%s563 + $0x18] sm:$0xf]
      %v571 = vld [vmem:[%s563 + $0x1c] sm:$0xf]
      %v572 = vld [vmem:[%s563 + $0x20] sm:$0xf]
      %v573 = vld [vmem:[%s563 + $0x24] sm:$0xf]
      %v574 = vld [vmem:[%s563 + $0x28] sm:$0xf]
      %v575 = vld [vmem:[%s563 + $0x2c] sm:$0xf]
      %v576 = vld [vmem:[%s563 + $0x30] sm:$0xf]
      %v577 = vld [vmem:[%s563 + $0x34] sm:$0xf]
      %v578 = vld [vmem:[%s563 + $0x38] sm:$0xf]
      %v579 = vld [vmem:[%s563 + $0x3c] sm:$0xf]
      %v584 = vunpack.c.l.b16 %v559
      %v585 = vunpack.c.l.b16 %v560
      %v586 = vunpack.c.l.b16 %v561
      %v587 = vunpack.c.l.b16 %v562
      %v588 = vpack.c.b16 %v585, %v584
      %v589 = vpack.c.b16 %v587, %v586
      %v608 = vunpack.c.l.b16 %v564
      %v609 = vunpack.c.l.b16 %v565
      %v610 = vunpack.c.l.b16 %v566
      %v611 = vunpack.c.l.b16 %v567
      %v612 = vunpack.c.l.b16 %v568
      %v613 = vunpack.c.l.b16 %v569
      %v614 = vunpack.c.l.b16 %v570
      %v615 = vunpack.c.l.b16 %v571
      %v616 = vunpack.c.l.b16 %v572
      %v617 = vunpack.c.l.b16 %v573
      %v618 = vunpack.c.l.b16 %v574
      %v619 = vunpack.c.l.b16 %v575
      %v620 = vunpack.c.l.b16 %v576
      %v621 = vunpack.c.l.b16 %v577
      %v622 = vunpack.c.l.b16 %v578
      %v623 = vunpack.c.l.b16 %v579
      %v624 = vpack.c.b16 %v609, %v608
      %v625 = vpack.c.b16 %v611, %v610
      %v626 = vpack.c.b16 %v613, %v612
      %v627 = vpack.c.b16 %v615, %v614
      %v628 = vpack.c.b16 %v617, %v616
      %v629 = vpack.c.b16 %v619, %v618
      %v630 = vpack.c.b16 %v621, %v620
      %v631 = vpack.c.b16 %v623, %v622
      %640 = vmatpush.bf16.msra.mxu0 %v631
      %641 = vmatpush.bf16.msra.mxu0 %v630
      %642 = vmatpush.bf16.msra.mxu0 %v629
      %643 = vmatpush.bf16.msra.mxu0 %v628
      %644 = vmatpush.bf16.msra.mxu0 %v627
      %645 = vmatpush.bf16.msra.mxu0 %v626
      %646 = vmatpush.bf16.msra.mxu0 %v625
      %647 = vmatpush.bf16.msra.mxu0 %v624
      %648 = vmatmul.bf16.gmra.mxu0 %v588
      %v649 = vpop.f32.mrf.mxu0
      %v650 = vadd.f32 0.0, %v649
      %v651 = vpop.f32.mrf.mxu0
      %v652 = vadd.f32 0.0, %v651
      %653 = vmatmul.bf16.gmra.mxu0 %v589
      %v654 = vpop.f32.mrf.mxu0
      %v655 = vadd.f32 0.0, %v654
      %v656 = vpop.f32.mrf.mxu0
      %v657 = vadd.f32 0.0, %v656
      %658 = vdwg.mxu0
      %v659 = vld [vmem:[#allocation2] sm:$0xff]
      %v660 = vld [vmem:[#allocation2 + $0x8] sm:$0xff]
      %v661 = vld [vmem:[#allocation2 + $0x10] sm:$0xff]
      %v662 = vld [vmem:[#allocation2 + $0x18] sm:$0xff]
      %v663 = vadd.f32 %v659, %v650
      %v664 = vadd.f32 %v660, %v652
      %v665 = vadd.f32 %v661, %v655
      %v666 = vadd.f32 %v662, %v657
      %667 = vst [vmem:[#allocation2] sm:$0xff] %v663
      %668 = vst [vmem:[#allocation2 + $0x8] sm:$0xff] %v664
      %669 = vst [vmem:[#allocation2 + $0x10] sm:$0xff] %v665
      %670 = vst [vmem:[#allocation2 + $0x18] sm:$0xff] %v666
      %s671 = scalar_lea.vmem %s165, 24
      %v672 = vld [vmem:[%s671] sm:$0xf]
      %v673 = vld [vmem:[%s671 + $0x20] sm:$0xf]
      %v674 = vld [vmem:[%s671 + $0x40] sm:$0xf]
      %v675 = vld [vmem:[%s671 + $0x60] sm:$0xf]
      %s676 = scalar_lea.vmem %s1, 256
      %v677 = vld [vmem:[%s676] sm:$0xf]
      %v678 = vld [vmem:[%s676 + $0x4] sm:$0xf]
      %v679 = vld [vmem:[%s676 + $0x8] sm:$0xf]
      %v680 = vld [vmem:[%s676 + $0xc] sm:$0xf]
      %v681 = vld [vmem:[%s676 + $0x10] sm:$0xf]
      %v682 = vld [vmem:[%s676 + $0x14] sm:$0xf]
      %v683 = vld [vmem:[%s676 + $0x18] sm:$0xf]
      %v684 = vld [vmem:[%s676 + $0x1c] sm:$0xf]
      %v685 = vld [vmem:[%s676 + $0x20] sm:$0xf]
      %v686 = vld [vmem:[%s676 + $0x24] sm:$0xf]
      %v687 = vld [vmem:[%s676 + $0x28] sm:$0xf]
      %v688 = vld [vmem:[%s676 + $0x2c] sm:$0xf]
      %v689 = vld [vmem:[%s676 + $0x30] sm:$0xf]
      %v690 = vld [vmem:[%s676 + $0x34] sm:$0xf]
      %v691 = vld [vmem:[%s676 + $0x38] sm:$0xf]
      %v692 = vld [vmem:[%s676 + $0x3c] sm:$0xf]
      %v697 = vunpack.c.l.b16 %v672
      %v698 = vunpack.c.l.b16 %v673
      %v699 = vunpack.c.l.b16 %v674
      %v700 = vunpack.c.l.b16 %v675
      %v701 = vpack.c.b16 %v698, %v697
      %v702 = vpack.c.b16 %v700, %v699
      %v721 = vunpack.c.l.b16 %v677
      %v722 = vunpack.c.l.b16 %v678
      %v723 = vunpack.c.l.b16 %v679
      %v724 = vunpack.c.l.b16 %v680
      %v725 = vunpack.c.l.b16 %v681
      %v726 = vunpack.c.l.b16 %v682
      %v727 = vunpack.c.l.b16 %v683
      %v728 = vunpack.c.l.b16 %v684
      %v729 = vunpack.c.l.b16 %v685
      %v730 = vunpack.c.l.b16 %v686
      %v731 = vunpack.c.l.b16 %v687
      %v732 = vunpack.c.l.b16 %v688
      %v733 = vunpack.c.l.b16 %v689
      %v734 = vunpack.c.l.b16 %v690
      %v735 = vunpack.c.l.b16 %v691
      %v736 = vunpack.c.l.b16 %v692
      %v737 = vpack.c.b16 %v722, %v721
      %v738 = vpack.c.b16 %v724, %v723
      %v739 = vpack.c.b16 %v726, %v725
      %v740 = vpack.c.b16 %v728, %v727
      %v741 = vpack.c.b16 %v730, %v729
      %v742 = vpack.c.b16 %v732, %v731
      %v743 = vpack.c.b16 %v734, %v733
      %v744 = vpack.c.b16 %v736, %v735
      %753 = vmatpush.bf16.msra.mxu0 %v744
      %754 = vmatpush.bf16.msra.mxu0 %v743
      %755 = vmatpush.bf16.msra.mxu0 %v742
      %756 = vmatpush.bf16.msra.mxu0 %v741
      %757 = vmatpush.bf16.msra.mxu0 %v740
      %758 = vmatpush.bf16.msra.mxu0 %v739
      %759 = vmatpush.bf16.msra.mxu0 %v738
      %760 = vmatpush.bf16.msra.mxu0 %v737
      %761 = vmatmul.bf16.gmra.mxu0 %v701
      %v762 = vpop.f32.mrf.mxu0
      %v763 = vadd.f32 0.0, %v762
      %v764 = vpop.f32.mrf.mxu0
      %v765 = vadd.f32 0.0, %v764
      %766 = vmatmul.bf16.gmra.mxu0 %v702
      %v767 = vpop.f32.mrf.mxu0
      %v768 = vadd.f32 0.0, %v767
      %v769 = vpop.f32.mrf.mxu0
      %v770 = vadd.f32 0.0, %v769
      %771 = vdwg.mxu0
      %v772 = vld [vmem:[#allocation2] sm:$0xff]
      %v773 = vld [vmem:[#allocation2 + $0x8] sm:$0xff]
      %v774 = vld [vmem:[#allocation2 + $0x10] sm:$0xff]
      %v775 = vld [vmem:[#allocation2 + $0x18] sm:$0xff]
      %v776 = vadd.f32 %v772, %v763
      %v777 = vadd.f32 %v773, %v765
      %v778 = vadd.f32 %v774, %v768
      %v779 = vadd.f32 %v775, %v770
      %780 = vst [vmem:[#allocation2] sm:$0xff] %v776
      %781 = vst [vmem:[#allocation2 + $0x8] sm:$0xff] %v777
      %782 = vst [vmem:[#allocation2 + $0x10] sm:$0xff] %v778
      %783 = vst [vmem:[#allocation2 + $0x18] sm:$0xff] %v779
      %v784 = vld [vmem:[%s558] sm:$0xf]
      %v785 = vld [vmem:[%s558 + $0x4] sm:$0x1]
      %v786 = vld [vmem:[%s558 + $0x20] sm:$0xf]
      %v787 = vld [vmem:[%s558 + $0x24] sm:$0x1]
      %v788 = vld [vmem:[%s558 + $0x40] sm:$0xf]
      %v789 = vld [vmem:[%s558 + $0x44] sm:$0x1]
      %v790 = vld [vmem:[%s558 + $0x60] sm:$0xf]
      %v791 = vld [vmem:[%s558 + $0x64] sm:$0x1]
      %v793 = vshrl.u32 %v784, 16
      %v795 = vrot.slane %v793, 4
      %v796 = vshll.u32 %v784, 16
      %v798 = vrot.slane %v796, 5
      %v799 = vor.u32 %v795, %v798
      %v800 = vrot.slane %v799, 4
      %v802 = vshll.u32 %v785, 16
      %v804 = vrot.slane %v802, 5
      %v805 = vsel %vm397, %v800, %v804
      %v807 = vshrl.u32 %v786, 16
      %v809 = vrot.slane %v807, 4
      %v810 = vshll.u32 %v786, 16
      %v812 = vrot.slane %v810, 5
      %v813 = vor.u32 %v809, %v812
      %v814 = vrot.slane %v813, 4
      %v816 = vshll.u32 %v787, 16
      %v818 = vrot.slane %v816, 5
      %v819 = vsel %vm397, %v814, %v818
      %v821 = vshrl.u32 %v788, 16
      %v823 = vrot.slane %v821, 4
      %v824 = vshll.u32 %v788, 16
      %v826 = vrot.slane %v824, 5
      %v827 = vor.u32 %v823, %v826
      %v828 = vrot.slane %v827, 4
      %v830 = vshll.u32 %v789, 16
      %v832 = vrot.slane %v830, 5
      %v833 = vsel %vm397, %v828, %v832
      %v835 = vshrl.u32 %v790, 16
      %v837 = vrot.slane %v835, 4
      %v838 = vshll.u32 %v790, 16
      %v840 = vrot.slane %v838, 5
      %v841 = vor.u32 %v837, %v840
      %v842 = vrot.slane %v841, 4
      %v844 = vshll.u32 %v791, 16
      %v846 = vrot.slane %v844, 5
      %v847 = vsel %vm397, %v842, %v846
      %s848 = scalar_lea.vmem %s1, 320
      %v849 = vld [vmem:[%s848] sm:$0xf]
      %v850 = vld [vmem:[%s848 + $0x4] sm:$0xf]
      %v851 = vld [vmem:[%s848 + $0x8] sm:$0xf]
      %v852 = vld [vmem:[%s848 + $0xc] sm:$0xf]
      %v853 = vld [vmem:[%s848 + $0x10] sm:$0xf]
      %v854 = vld [vmem:[%s848 + $0x14] sm:$0xf]
      %v855 = vld [vmem:[%s848 + $0x18] sm:$0xf]
      %v856 = vld [vmem:[%s848 + $0x1c] sm:$0xf]
      %v857 = vld [vmem:[%s848 + $0x20] sm:$0xf]
      %v858 = vld [vmem:[%s848 + $0x24] sm:$0xf]
      %v859 = vld [vmem:[%s848 + $0x28] sm:$0xf]
      %v860 = vld [vmem:[%s848 + $0x2c] sm:$0xf]
      %v861 = vld [vmem:[%s848 + $0x30] sm:$0xf]
      %v862 = vld [vmem:[%s848 + $0x34] sm:$0xf]
      %v863 = vld [vmem:[%s848 + $0x38] sm:$0xf]
      %v864 = vld [vmem:[%s848 + $0x3c] sm:$0xf]
      %v865 = vunpack.c.l.b16 %v805
      %v866 = vunpack.c.l.b16 %v819
      %v867 = vunpack.c.l.b16 %v833
      %v868 = vunpack.c.l.b16 %v847
      %v869 = vpack.c.b16 %v866, %v865
      %v870 = vpack.c.b16 %v868, %v867
      %v889 = vunpack.c.l.b16 %v849
      %v890 = vunpack.c.l.b16 %v850
      %v891 = vunpack.c.l.b16 %v851
      %v892 = vunpack.c.l.b16 %v852
      %v893 = vunpack.c.l.b16 %v853
      %v894 = vunpack.c.l.b16 %v854
      %v895 = vunpack.c.l.b16 %v855
      %v896 = vunpack.c.l.b16 %v856
      %v897 = vunpack.c.l.b16 %v857
      %v898 = vunpack.c.l.b16 %v858
      %v899 = vunpack.c.l.b16 %v859
      %v900 = vunpack.c.l.b16 %v860
      %v901 = vunpack.c.l.b16 %v861
      %v902 = vunpack.c.l.b16 %v862
      %v903 = vunpack.c.l.b16 %v863
      %v904 = vunpack.c.l.b16 %v864
      %v905 = vpack.c.b16 %v890, %v889
      %v906 = vpack.c.b16 %v892, %v891
      %v907 = vpack.c.b16 %v894, %v893
      %v908 = vpack.c.b16 %v896, %v895
      %v909 = vpack.c.b16 %v898, %v897
      %v910 = vpack.c.b16 %v900, %v899
      %v911 = vpack.c.b16 %v902, %v901
      %v912 = vpack.c.b16 %v904, %v903
      %921 = vmatpush.bf16.msra.mxu0 %v912
      %922 = vmatpush.bf16.msra.mxu0 %v911
      %923 = vmatpush.bf16.msra.mxu0 %v910
      %924 = vmatpush.bf16.msra.mxu0 %v909
      %925 = vmatpush.bf16.msra.mxu0 %v908
      %926 = vmatpush.bf16.msra.mxu0 %v907
      %927 = vmatpush.bf16.msra.mxu0 %v906
      %928 = vmatpush.bf16.msra.mxu0 %v905
      %929 = vmatmul.bf16.gmra.mxu0 %v869
      %v930 = vpop.f32.mrf.mxu0
      %v931 = vadd.f32 0.0, %v930
      %v932 = vpop.f32.mrf.mxu0
      %v933 = vadd.f32 0.0, %v932
      %934 = vmatmul.bf16.gmra.mxu0 %v870
      %v935 = vpop.f32.mrf.mxu0
      %v936 = vadd.f32 0.0, %v935
      %v937 = vpop.f32.mrf.mxu0
      %v938 = vadd.f32 0.0, %v937
      %939 = vdwg.mxu0
      %v940 = vld [vmem:[#allocation2] sm:$0xff]
      %v941 = vld [vmem:[#allocation2 + $0x8] sm:$0xff]
      %v942 = vld [vmem:[#allocation2 + $0x10] sm:$0xff]
      %v943 = vld [vmem:[#allocation2 + $0x18] sm:$0xff]
      %v944 = vadd.f32 %v940, %v931
      %v945 = vadd.f32 %v941, %v933
      %v946 = vadd.f32 %v942, %v936
      %v947 = vadd.f32 %v943, %v938
      %948 = vst [vmem:[#allocation2] sm:$0xff] %v944
      %949 = vst [vmem:[#allocation2 + $0x8] sm:$0xff] %v945
      %950 = vst [vmem:[#allocation2 + $0x10] sm:$0xff] %v946
      %951 = vst [vmem:[#allocation2 + $0x18] sm:$0xff] %v947
      %s952 = scalar_lea.vmem %s165, 32
      %v953 = vld [vmem:[%s952] sm:$0xf]
      %v954 = vld [vmem:[%s952 + $0x20] sm:$0xf]
      %v955 = vld [vmem:[%s952 + $0x40] sm:$0xf]
      %v956 = vld [vmem:[%s952 + $0x60] sm:$0xf]
      %s957 = scalar_lea.vmem %s1, 384
      %v958 = vld [vmem:[%s957] sm:$0xf]
      %v959 = vld [vmem:[%s957 + $0x4] sm:$0xf]
      %v960 = vld [vmem:[%s957 + $0x8] sm:$0xf]
      %v961 = vld [vmem:[%s957 + $0xc] sm:$0xf]
      %v962 = vld [vmem:[%s957 + $0x10] sm:$0xf]
      %v963 = vld [vmem:[%s957 + $0x14] sm:$0xf]
      %v964 = vld [vmem:[%s957 + $0x18] sm:$0xf]
      %v965 = vld [vmem:[%s957 + $0x1c] sm:$0xf]
      %v966 = vld [vmem:[%s957 + $0x20] sm:$0xf]
      %v967 = vld [vmem:[%s957 + $0x24] sm:$0xf]
      %v968 = vld [vmem:[%s957 + $0x28] sm:$0xf]
      %v969 = vld [vmem:[%s957 + $0x2c] sm:$0xf]
      %v970 = vld [vmem:[%s957 + $0x30] sm:$0xf]
      %v971 = vld [vmem:[%s957 + $0x34] sm:$0xf]
      %v972 = vld [vmem:[%s957 + $0x38] sm:$0xf]
      %v973 = vld [vmem:[%s957 + $0x3c] sm:$0xf]
      %v978 = vunpack.c.l.b16 %v953
      %v979 = vunpack.c.l.b16 %v954
      %v980 = vunpack.c.l.b16 %v955
      %v981 = vunpack.c.l.b16 %v956
      %v982 = vpack.c.b16 %v979, %v978
      %v983 = vpack.c.b16 %v981, %v980
      %v1002 = vunpack.c.l.b16 %v958
      %v1003 = vunpack.c.l.b16 %v959
      %v1004 = vunpack.c.l.b16 %v960
      %v1005 = vunpack.c.l.b16 %v961
      %v1006 = vunpack.c.l.b16 %v962
      %v1007 = vunpack.c.l.b16 %v963
      %v1008 = vunpack.c.l.b16 %v964
      %v1009 = vunpack.c.l.b16 %v965
      %v1010 = vunpack.c.l.b16 %v966
      %v1011 = vunpack.c.l.b16 %v967
      %v1012 = vunpack.c.l.b16 %v968
      %v1013 = vunpack.c.l.b16 %v969
      %v1014 = vunpack.c.l.b16 %v970
      %v1015 = vunpack.c.l.b16 %v971
      %v1016 = vunpack.c.l.b16 %v972
      %v1017 = vunpack.c.l.b16 %v973
      %v1018 = vpack.c.b16 %v1003, %v1002
      %v1019 = vpack.c.b16 %v1005, %v1004
      %v1020 = vpack.c.b16 %v1007, %v1006
      %v1021 = vpack.c.b16 %v1009, %v1008
      %v1022 = vpack.c.b16 %v1011, %v1010
      %v1023 = vpack.c.b16 %v1013, %v1012
      %v1024 = vpack.c.b16 %v1015, %v1014
      %v1025 = vpack.c.b16 %v1017, %v1016
      %1034 = vmatpush.bf16.msra.mxu0 %v1025
      %1035 = vmatpush.bf16.msra.mxu0 %v1024
      %1036 = vmatpush.bf16.msra.mxu0 %v1023
      %1037 = vmatpush.bf16.msra.mxu0 %v1022
      %1038 = vmatpush.bf16.msra.mxu0 %v1021
      %1039 = vmatpush.bf16.msra.mxu0 %v1020
      %1040 = vmatpush.bf16.msra.mxu0 %v1019
      %1041 = vmatpush.bf16.msra.mxu0 %v1018
      %1042 = vmatmul.bf16.gmra.mxu0 %v982
      %v1043 = vpop.f32.mrf.mxu0
      %v1044 = vadd.f32 0.0, %v1043
      %v1045 = vpop.f32.mrf.mxu0
      %v1046 = vadd.f32 0.0, %v1045
      %1047 = vmatmul.bf16.gmra.mxu0 %v983
      %v1048 = vpop.f32.mrf.mxu0
      %v1049 = vadd.f32 0.0, %v1048
      %v1050 = vpop.f32.mrf.mxu0
      %v1051 = vadd.f32 0.0, %v1050
      %1052 = vdwg.mxu0
      %v1053 = vld [vmem:[#allocation2] sm:$0xff]
      %v1054 = vld [vmem:[#allocation2 + $0x8] sm:$0xff]
      %v1055 = vld [vmem:[#allocation2 + $0x10] sm:$0xff]
      %v1056 = vld [vmem:[#allocation2 + $0x18] sm:$0xff]
      %v1057 = vadd.f32 %v1053, %v1044
      %v1058 = vadd.f32 %v1054, %v1046
      %v1059 = vadd.f32 %v1055, %v1049
      %v1060 = vadd.f32 %v1056, %v1051
      %1061 = vst [vmem:[#allocation2] sm:$0xff] %v1057
      %1062 = vst [vmem:[#allocation2 + $0x8] sm:$0xff] %v1058
      %1063 = vst [vmem:[#allocation2 + $0x10] sm:$0xff] %v1059
      %1064 = vst [vmem:[#allocation2 + $0x18] sm:$0xff] %v1060
      %s1065 = scalar_lea.vmem %s165, 40
      %v1066 = vld [vmem:[%s1065] sm:$0xf]
      %v1067 = vld [vmem:[%s1065 + $0x20] sm:$0xf]
      %v1068 = vld [vmem:[%s1065 + $0x40] sm:$0xf]
      %v1069 = vld [vmem:[%s1065 + $0x60] sm:$0xf]
      %s1070 = scalar_lea.vmem %s1, 448
      %v1071 = vld [vmem:[%s1070] sm:$0xf]
      %v1072 = vld [vmem:[%s1070 + $0x4] sm:$0xf]
      %v1073 = vld [vmem:[%s1070 + $0x8] sm:$0xf]
      %v1074 = vld [vmem:[%s1070 + $0xc] sm:$0xf]
      %v1075 = vld [vmem:[%s1070 + $0x10] sm:$0xf]
      %v1076 = vld [vmem:[%s1070 + $0x14] sm:$0xf]
      %v1077 = vld [vmem:[%s1070 + $0x18] sm:$0xf]
      %v1078 = vld [vmem:[%s1070 + $0x1c] sm:$0xf]
      %v1079 = vld [vmem:[%s1070 + $0x20] sm:$0xf]
      %v1080 = vld [vmem:[%s1070 + $0x24] sm:$0xf]
      %v1081 = vld [vmem:[%s1070 + $0x28] sm:$0xf]
      %v1082 = vld [vmem:[%s1070 + $0x2c] sm:$0xf]
      %v1083 = vld [vmem:[%s1070 + $0x30] sm:$0xf]
      %v1084 = vld [vmem:[%s1070 + $0x34] sm:$0xf]
      %v1085 = vld [vmem:[%s1070 + $0x38] sm:$0xf]
      %v1086 = vld [vmem:[%s1070 + $0x3c] sm:$0xf]
      %v1091 = vunpack.c.l.b16 %v1066
      %v1092 = vunpack.c.l.b16 %v1067
      %v1093 = vunpack.c.l.b16 %v1068
      %v1094 = vunpack.c.l.b16 %v1069
      %v1095 = vpack.c.b16 %v1092, %v1091
      %v1096 = vpack.c.b16 %v1094, %v1093
      %v1115 = vunpack.c.l.b16 %v1071
      %v1116 = vunpack.c.l.b16 %v1072
      %v1117 = vunpack.c.l.b16 %v1073
      %v1118 = vunpack.c.l.b16 %v1074
      %v1119 = vunpack.c.l.b16 %v1075
      %v1120 = vunpack.c.l.b16 %v1076
      %v1121 = vunpack.c.l.b16 %v1077
      %v1122 = vunpack.c.l.b16 %v1078
      %v1123 = vunpack.c.l.b16 %v1079
      %v1124 = vunpack.c.l.b16 %v1080
      %v1125 = vunpack.c.l.b16 %v1081
      %v1126 = vunpack.c.l.b16 %v1082
      %v1127 = vunpack.c.l.b16 %v1083
      %v1128 = vunpack.c.l.b16 %v1084
      %v1129 = vunpack.c.l.b16 %v1085
      %v1130 = vunpack.c.l.b16 %v1086
      %v1131 = vpack.c.b16 %v1116, %v1115
      %v1132 = vpack.c.b16 %v1118, %v1117
      %v1133 = vpack.c.b16 %v1120, %v1119
      %v1134 = vpack.c.b16 %v1122, %v1121
      %v1135 = vpack.c.b16 %v1124, %v1123
      %v1136 = vpack.c.b16 %v1126, %v1125
      %v1137 = vpack.c.b16 %v1128, %v1127
      %v1138 = vpack.c.b16 %v1130, %v1129
      %1147 = vmatpush.bf16.msra.mxu0 %v1138
      %1148 = vmatpush.bf16.msra.mxu0 %v1137
      %1149 = vmatpush.bf16.msra.mxu0 %v1136
      %1150 = vmatpush.bf16.msra.mxu0 %v1135
      %1151 = vmatpush.bf16.msra.mxu0 %v1134
      %1152 = vmatpush.bf16.msra.mxu0 %v1133
      %1153 = vmatpush.bf16.msra.mxu0 %v1132
      %1154 = vmatpush.bf16.msra.mxu0 %v1131
      %1155 = vmatmul.bf16.gmra.mxu0 %v1095
      %v1156 = vpop.f32.mrf.mxu0
      %v1157 = vadd.f32 0.0, %v1156
      %v1158 = vpop.f32.mrf.mxu0
      %v1159 = vadd.f32 0.0, %v1158
      %1160 = vmatmul.bf16.gmra.mxu0 %v1096
      %v1161 = vpop.f32.mrf.mxu0
      %v1162 = vadd.f32 0.0, %v1161
      %v1163 = vpop.f32.mrf.mxu0
      %v1164 = vadd.f32 0.0, %v1163
      %1165 = vdwg.mxu0
      %v1166 = vld [vmem:[#allocation2] sm:$0xff]
      %v1167 = vld [vmem:[#allocation2 + $0x8] sm:$0xff]
      %v1168 = vld [vmem:[#allocation2 + $0x10] sm:$0xff]
      %v1169 = vld [vmem:[#allocation2 + $0x18] sm:$0xff]
      %v1170 = vadd.f32 %v1166, %v1157
      %v1171 = vadd.f32 %v1167, %v1159
      %v1172 = vadd.f32 %v1168, %v1162
      %v1173 = vadd.f32 %v1169, %v1164
      %1174 = vst [vmem:[#allocation2] sm:$0xff] %v1170
      %1175 = vst [vmem:[#allocation2 + $0x8] sm:$0xff] %v1171
      %1176 = vst [vmem:[#allocation2 + $0x10] sm:$0xff] %v1172
      %1177 = vst [vmem:[#allocation2 + $0x18] sm:$0xff] %v1173
      %v1178 = vld [vmem:[%s952] sm:$0xf]
      %v1179 = vld [vmem:[%s952 + $0x4] sm:$0x1]
      %v1180 = vld [vmem:[%s952 + $0x20] sm:$0xf]
      %v1181 = vld [vmem:[%s952 + $0x24] sm:$0x1]
      %v1182 = vld [vmem:[%s952 + $0x40] sm:$0xf]
      %v1183 = vld [vmem:[%s952 + $0x44] sm:$0x1]
      %v1184 = vld [vmem:[%s952 + $0x60] sm:$0xf]
      %v1185 = vld [vmem:[%s952 + $0x64] sm:$0x1]
      %v1187 = vshrl.u32 %v1178, 16
      %v1189 = vrot.slane %v1187, 4
      %v1190 = vshll.u32 %v1178, 16
      %v1192 = vrot.slane %v1190, 5
      %v1193 = vor.u32 %v1189, %v1192
      %v1194 = vrot.slane %v1193, 4
      %v1196 = vshll.u32 %v1179, 16
      %v1198 = vrot.slane %v1196, 5
      %v1199 = vsel %vm397, %v1194, %v1198
      %v1201 = vshrl.u32 %v1180, 16
      %v1203 = vrot.slane %v1201, 4
      %v1204 = vshll.u32 %v1180, 16
      %v1206 = vrot.slane %v1204, 5
      %v1207 = vor.u32 %v1203, %v1206
      %v1208 = vrot.slane %v1207, 4
      %v1210 = vshll.u32 %v1181, 16
      %v1212 = vrot.slane %v1210, 5
      %v1213 = vsel %vm397, %v1208, %v1212
      %v1215 = vshrl.u32 %v1182, 16
      %v1217 = vrot.slane %v1215, 4
      %v1218 = vshll.u32 %v1182, 16
      %v1220 = vrot.slane %v1218, 5
      %v1221 = vor.u32 %v1217, %v1220
      %v1222 = vrot.slane %v1221, 4
      %v1224 = vshll.u32 %v1183, 16
      %v1226 = vrot.slane %v1224, 5
      %v1227 = vsel %vm397, %v1222, %v1226
      %v1229 = vshrl.u32 %v1184, 16
      %v1231 = vrot.slane %v1229, 4
      %v1232 = vshll.u32 %v1184, 16
      %v1234 = vrot.slane %v1232, 5
      %v1235 = vor.u32 %v1231, %v1234
      %v1236 = vrot.slane %v1235, 4
      %v1238 = vshll.u32 %v1185, 16
      %v1240 = vrot.slane %v1238, 5
      %v1241 = vsel %vm397, %v1236, %v1240
      %s1242 = scalar_lea.vmem %s1, 512
      %v1243 = vld [vmem:[%s1242] sm:$0xf]
      %v1244 = vld [vmem:[%s1242 + $0x4] sm:$0xf]
      %v1245 = vld [vmem:[%s1242 + $0x8] sm:$0xf]
      %v1246 = vld [vmem:[%s1242 + $0xc] sm:$0xf]
      %v1247 = vld [vmem:[%s1242 + $0x10] sm:$0xf]
      %v1248 = vld [vmem:[%s1242 + $0x14] sm:$0xf]
      %v1249 = vld [vmem:[%s1242 + $0x18] sm:$0xf]
      %v1250 = vld [vmem:[%s1242 + $0x1c] sm:$0xf]
      %v1251 = vld [vmem:[%s1242 + $0x20] sm:$0xf]
      %v1252 = vld [vmem:[%s1242 + $0x24] sm:$0xf]
      %v1253 = vld [vmem:[%s1242 + $0x28] sm:$0xf]
      %v1254 = vld [vmem:[%s1242 + $0x2c] sm:$0xf]
      %v1255 = vld [vmem:[%s1242 + $0x30] sm:$0xf]
      %v1256 = vld [vmem:[%s1242 + $0x34] sm:$0xf]
      %v1257 = vld [vmem:[%s1242 + $0x38] sm:$0xf]
      %v1258 = vld [vmem:[%s1242 + $0x3c] sm:$0xf]
      %v1259 = vunpack.c.l.b16 %v1199
      %v1260 = vunpack.c.l.b16 %v1213
      %v1261 = vunpack.c.l.b16 %v1227
      %v1262 = vunpack.c.l.b16 %v1241
      %v1263 = vpack.c.b16 %v1260, %v1259
      %v1264 = vpack.c.b16 %v1262, %v1261
      %v1283 = vunpack.c.l.b16 %v1243
      %v1284 = vunpack.c.l.b16 %v1244
      %v1285 = vunpack.c.l.b16 %v1245
      %v1286 = vunpack.c.l.b16 %v1246
      %v1287 = vunpack.c.l.b16 %v1247
      %v1288 = vunpack.c.l.b16 %v1248
      %v1289 = vunpack.c.l.b16 %v1249
      %v1290 = vunpack.c.l.b16 %v1250
      %v1291 = vunpack.c.l.b16 %v1251
      %v1292 = vunpack.c.l.b16 %v1252
      %v1293 = vunpack.c.l.b16 %v1253
      %v1294 = vunpack.c.l.b16 %v1254
      %v1295 = vunpack.c.l.b16 %v1255
      %v1296 = vunpack.c.l.b16 %v1256
      %v1297 = vunpack.c.l.b16 %v1257
      %v1298 = vunpack.c.l.b16 %v1258
      %v1299 = vpack.c.b16 %v1284, %v1283
      %v1300 = vpack.c.b16 %v1286, %v1285
      %v1301 = vpack.c.b16 %v1288, %v1287
      %v1302 = vpack.c.b16 %v1290, %v1289
      %v1303 = vpack.c.b16 %v1292, %v1291
      %v1304 = vpack.c.b16 %v1294, %v1293
      %v1305 = vpack.c.b16 %v1296, %v1295
      %v1306 = vpack.c.b16 %v1298, %v1297
      %1315 = vmatpush.bf16.msra.mxu0 %v1306
      %1316 = vmatpush.bf16.msra.mxu0 %v1305
      %1317 = vmatpush.bf16.msra.mxu0 %v1304
      %1318 = vmatpush.bf16.msra.mxu0 %v1303
      %1319 = vmatpush.bf16.msra.mxu0 %v1302
      %1320 = vmatpush.bf16.msra.mxu0 %v1301
      %1321 = vmatpush.bf16.msra.mxu0 %v1300
      %1322 = vmatpush.bf16.msra.mxu0 %v1299
      %1323 = vmatmul.bf16.gmra.mxu0 %v1263
      %v1324 = vpop.f32.mrf.mxu0
      %v1325 = vadd.f32 0.0, %v1324
      %v1326 = vpop.f32.mrf.mxu0
      %v1327 = vadd.f32 0.0, %v1326
      %1328 = vmatmul.bf16.gmra.mxu0 %v1264
      %v1329 = vpop.f32.mrf.mxu0
      %v1330 = vadd.f32 0.0, %v1329
      %v1331 = vpop.f32.mrf.mxu0
      %v1332 = vadd.f32 0.0, %v1331
      %1333 = vdwg.mxu0
      %v1334 = vld [vmem:[#allocation2] sm:$0xff]
      %v1335 = vld [vmem:[#allocation2 + $0x8] sm:$0xff]
      %v1336 = vld [vmem:[#allocation2 + $0x10] sm:$0xff]
      %v1337 = vld [vmem:[#allocation2 + $0x18] sm:$0xff]
      %v1338 = vadd.f32 %v1334, %v1325
      %v1339 = vadd.f32 %v1335, %v1327
      %v1340 = vadd.f32 %v1336, %v1330
      %v1341 = vadd.f32 %v1337, %v1332
      %1342 = vst [vmem:[#allocation2] sm:$0xff] %v1338
      %1343 = vst [vmem:[#allocation2 + $0x8] sm:$0xff] %v1339
      %1344 = vst [vmem:[#allocation2 + $0x10] sm:$0xff] %v1340
      %1345 = vst [vmem:[#allocation2 + $0x18] sm:$0xff] %v1341
      %v1346 = vld [vmem:[#allocation2] sm:$0xff]
      %v1347 = vld [vmem:[#allocation2 + $0x8] sm:$0xff]
      %v1348 = vld [vmem:[#allocation2 + $0x10] sm:$0xff]
      %v1349 = vld [vmem:[#allocation2 + $0x18] sm:$0xff]
      %v1350 = vld [vmem:[%s2] sm:$0x1]
      %v1352 = vperm.slane %v1350, 0
      %v1354 = vadd.f32 %v1346, %v1352
      %v1355 = vadd.f32 %v1347, %v1352
      %v1356 = vadd.f32 %v1348, %v1352
      %v1357 = vadd.f32 %v1349, %v1352
      %v1358 = vmax.f32 %v1354, 0.0
      %v1359 = vmax.f32 %v1355, 0.0
      %v1360 = vmax.f32 %v1356, 0.0
      %v1361 = vmax.f32 %v1357, 0.0
      %v1362 = vpack.c.bf16 %v1358, %v1358
      %v1363 = vpack.c.bf16 %v1359, %v1359
      %v1364 = vpack.c.bf16 %v1360, %v1360
      %v1365 = vpack.c.bf16 %v1361, %v1361
      %1366 = vst [vmem:[%s170] sm:$0xf] %v1362
      %1367 = vst [vmem:[%s170 + $0x4] sm:$0xf] %v1363
      %1368 = vst [vmem:[%s170 + $0x8] sm:$0xf] %v1364
      %1369 = vst [vmem:[%s170 + $0xc] sm:$0xf] %v1365
      %p1370 = scmp.lt.s32.totalorder %s14, 1
      %s1371 = scalar_select %p1370, %s14, 1
      %s1372 = smul.addr %s1371, 4
      %s1373 = smul.addr %s1372, 4
      %s1374 = scalar_lea.vmem %s3, %s1373
      // Predicated region
      $region33: #{bottleneck_forward.4} parent=31 // pred_check
        %p1375 = pneg %p100
      $region34: #{bottleneck_forward.4} parent=31 // pred_check_branch
        %1377 = sbr.rel (%p1375) target = $region36
      $region35: #{bottleneck_forward.4} parent=31 // pred_region
        _
      $region36: #{bottleneck_forward.4} parent=31 // pred_fallthru
        _
    $region32: #{bottleneck_forward.4} parent=5 // pred_fallthru
      _
    %p1378 = scmp.le.s32.totalorder 2, %s9
    // Predicated region
    $region37: #{bottleneck_forward.4} parent=5 // pred_check
      %p1379 = pneg %p1378
    $region38: #{bottleneck_forward.4} parent=5 // pred_check_branch
      %1381 = sbr.rel (%p1379) target = $region40
    $region39: #{bottleneck_forward.4} parent=5 // pred_region
      %s1382 = ssub.s32 %s9, 2
      // Predicated region
      $region41: #{bottleneck_forward.4} parent=39 // pred_check
        %p1383 = pneg %p106
      $region42: #{bottleneck_forward.4} parent=39 // pred_check_branch
        %1385 = sbr.rel (%p1383) target = $region44
      $region43: #{bottleneck_forward.4} parent=39 // pred_region
        %p1386 = scmp.lt.s32.totalorder %s15, 1
        %s1387 = scalar_select %p1386, %s15, 1
        %s1388 = smul.addr %s1387, 4
        %s1389 = smul.addr %s1388, 4
        %s1390 = scalar_lea.vmem %s3, %s1389
      $region44: #{bottleneck_forward.4} parent=39 // pred_fallthru
        _
    $region40: #{bottleneck_forward.4} parent=5 // pred_fallthru
      _
  $region6: #{bottleneck_forward.4} parent=0 // loop_footer
    %s13 = sadd.s32 1, %s9
  $region7: #{bottleneck_forward.4} parent=0 // loop_footer_branch
    %8 = sbr.rel target = $region3
  $region8: #{bottleneck_forward.4} parent=0 // loop_exit
    _

</llo_original>
